<compile_context>
chip_gen: v7x
topology: tpu7x:2x2x1
jax: 0.10.0
libtpu: 0.0.40
codegen_flags: <defaults>
</compile_context>

<pallas_src>
import math

import jax
import jax.numpy as jnp
from jax import lax
from jax.experimental import pallas as pl
from jax.experimental.pallas import tpu as pltpu


# ----------------------------- fused Pallas kernel ------------------------- #

def make_fused_kernel(num_layers, T, BP, E, H, C, has_state):
    """Kernel: embedding-stub matmul + stacked LSTM recurrence + Linear head.

    Ref layout (all whole-array VMEM blocks, no grid):
      inputs : x (BP, ctx) f32, proj (ctx, T*E) bf16,
               [wih_t (in,4H) bf16, whh_t (H,4H) bf16, b (1,4H) f32] * num_layers,
               [h0 (L,BP,H) f32, c0 (L,BP,H) f32]      (only if has_state),
               fc_w_t (H,C) bf16, fc_b (1,C) f32
      outputs: logits (BP, C) f32
    """

    def kernel(*refs):
        idx = 0
        x_ref = refs[idx]; idx += 1
        proj_ref = refs[idx]; idx += 1
        layer_refs = []
        for _ in range(num_layers):
            layer_refs.append((refs[idx], refs[idx + 1], refs[idx + 2]))
            idx += 3
        if has_state:
            h0_ref = refs[idx]
            c0_ref = refs[idx + 1]
            idx += 2
        fcw_ref = refs[idx]; fcb_ref = refs[idx + 1]; idx += 2
        out_ref = refs[idx]

        # Chronos-stub embedding fused in: (BP, ctx) @ (ctx, T*E) -> tanh.
        emb = jnp.tanh(jnp.dot(x_ref[...].astype(jnp.bfloat16), proj_ref[...],
                               preferred_element_type=jnp.float32))      # (BP, T*E)

        # Lane mask of the g-gate block (PyTorch gate order i, f, g, o).
        # Hoisted out of all loops (JAX does not CSE broadcast_in_dim).
        lane = lax.broadcasted_iota(jnp.int32, (BP, 4 * H), 1)
        g_mask = (lane >= 2 * H) & (lane < 3 * H)

        # Layer-0 inputs: per-timestep register slabs (no VMEM scratch anywhere).
        xs = [emb[:, t * E:(t + 1) * E] for t in range(T)]               # T x (BP, E)

        h = None
        for l, (wih_ref, whh_ref, b_ref) in enumerate(layer_refs):
            wih = wih_ref[...]                                           # bf16 (in, 4H)
            whh = whh_ref[...]                                           # bf16 (H, 4H)
            b = b_ref[...]                                               # f32  (1, 4H)

            # One big bf16 matmul for every timestep's input projection; bias
            # folded in so nothing re-broadcasts inside the recurrence.
            x_cat = jnp.concatenate(xs, axis=0).astype(jnp.bfloat16)     # (T*BP, in)
            gx = jnp.dot(x_cat, wih, preferred_element_type=jnp.float32) + b

            if has_state:
                h = h0_ref[l]
                c = c0_ref[l]
            else:
                h = jnp.zeros((BP, H), jnp.float32)
                c = jnp.zeros((BP, H), jnp.float32)
            last_layer = (l == num_layers - 1)
            hs = []

            # TODO(synk): on v5e/v6e, hold W_hh resident across the time loop via
            # pltpu.matmul_push_rhs / matmul_acc_lhs / matmul_pop instead of
            # re-streaming the (H, 4H) RHS every serial step.
            for t in range(T):
                gates = (gx[t * BP:(t + 1) * BP, :]
                         + jnp.dot(h.astype(jnp.bfloat16), whh,
                                   preferred_element_type=jnp.float32))  # (BP, 4H)
                # Single full-vreg sigmoid; the g-gate pre-activations were
                # scaled by 2 at weight-prep time, so g = 2*sigma(2z)-1 = tanh(z).
                s = jax.nn.sigmoid(gates)
                act = jnp.where(g_mask, 2.0 * s - 1.0, s)
                # TODO(synk): verify via bundle dump whether these lane-offset
                # gate slices put relayouts on the critical path; if so, move the
                # alignment onto the XLU with pltpu.roll.
                i_g = act[:, 0 * H:1 * H]
                f_g = act[:, 1 * H:2 * H]
                g_g = act[:, 2 * H:3 * H]
                o_g = act[:, 3 * H:4 * H]
                c = f_g * c + i_g * g_g
                h = o_g * jnp.tanh(c)
                if not last_layer:
                    hs.append(h)            # stays in registers, no VMEM round trip

            if not last_layer:
                xs = hs

        # fc head on h_n of the last layer.
        out_ref[...] = (jnp.dot(h.astype(jnp.bfloat16), fcw_ref[...],
                                preferred_element_type=jnp.float32)
                        + fcb_ref[...]).astype(out_ref.dtype)

    return kernel


def fused_forward(x_pad, proj, layer_params, h0, c0, fc_w_t, fc_b,
                  *, T, BP, E, H, C):
    has_state = h0 is not None
    inputs = [x_pad, proj]
    for p in layer_params:
        inputs += [p["wih_t"], p["whh_t"], p["b"]]
    if has_state:
        inputs += [h0, c0]
    inputs += [fc_w_t, fc_b]

    # Everything is KB-sized at these shapes, so all operands sit whole in VMEM
    # and there is no grid.
    # TODO(synk): for production T/B, switch to a T-blocked grid (h/c carried in
    # scratch, T axis "arbitrary") with a batch-parallel leading axis for v7x's
    # two TensorCores, sizing blocks against 64 MiB VMEM (v7x) / the 16 MiB
    # default scoped limit (v5e) via pltpu.CompilerParams(vmem_limit_bytes=...).
    return pl.pallas_call(
        make_fused_kernel(len(layer_params), T, BP, E, H, C, has_state),
        out_shape=jax.ShapeDtypeStruct((BP, C), jnp.float32),
        in_specs=[pl.BlockSpec(memory_space=pltpu.MemorySpace.VMEM)] * len(inputs),
        out_specs=pl.BlockSpec(memory_space=pltpu.MemorySpace.VMEM),
    )(*inputs)


# ------------------------------ model wrapper ------------------------------- #

class LSTMClassifierPallas:
    def __init__(self, embedding_dim, hidden_size, num_classes, num_layers,
                 context_len, seq_len, key):
        self.E = embedding_dim
        self.H = hidden_size
        self.C = num_classes
        self.L = num_layers
        self.context_len = context_len
        self.T = seq_len

        keys = jax.random.split(key, 4 * num_layers + 2)
        k = 1.0 / math.sqrt(hidden_size)

        # Fold tanh(z) -> 2*sigmoid(2z)-1: pre-scale the g-gate columns by 2.
        col = jnp.arange(4 * hidden_size)
        g_scale = jnp.where((col >= 2 * hidden_size) & (col < 3 * hidden_size),
                            2.0, 1.0).astype(jnp.float32)

        self.layers = []        # kernel weights (bf16, g-gate pre-scaled)
        self._ref_layers = []   # untouched f32 weights for the pure-JAX reference
        for l in range(num_layers):
            in_dim = embedding_dim if l == 0 else hidden_size
            kw = keys[4 * l: 4 * l + 4]
            w_ih = jax.random.uniform(kw[0], (4 * hidden_size, in_dim),
                                      jnp.float32, -k, k)
            w_hh = jax.random.uniform(kw[1], (4 * hidden_size, hidden_size),
                                      jnp.float32, -k, k)
            b_ih = jax.random.uniform(kw[2], (4 * hidden_size,), jnp.float32, -k, k)
            b_hh = jax.random.uniform(kw[3], (4 * hidden_size,), jnp.float32, -k, k)
            self._ref_layers.append((w_ih, w_hh, b_ih + b_hh))
            self.layers.append(dict(
                wih_t=(w_ih.T * g_scale).astype(jnp.bfloat16),              # (in, 4H)
                whh_t=(w_hh.T * g_scale).astype(jnp.bfloat16),              # (H, 4H)
                b=((b_ih + b_hh) * g_scale).reshape(1, 4 * hidden_size)))   # (1, 4H)

        # fc: xavier_uniform weight (C, H), zero bias (matches reset_parameters).
        bound = math.sqrt(6.0 / (hidden_size + num_classes))
        w_fc = jax.random.uniform(keys[-2], (num_classes, hidden_size),
                                  jnp.float32, -bound, bound)
        self._ref_fc_w = w_fc
        self.fc_w_t = w_fc.T.astype(jnp.bfloat16)                           # (H, C)
        self.fc_b = jnp.zeros((1, num_classes), jnp.float32)

        # Deterministic stand-in for the Chronos embedding pipeline.
        proj = jax.random.normal(keys[-1], (context_len, seq_len * embedding_dim),
                                 jnp.float32) * 0.1
        self._ref_proj = proj
        self.embed_proj = proj.astype(jnp.bfloat16)

    def __call__(self, x, h0=None, c0=None):
        B = x.shape[0]
        BP = max(8, ((B + 7) // 8) * 8)       # pad batch to the f32 sublane tile

        x_pad = jnp.zeros((BP, self.context_len), jnp.float32)
        x_pad = x_pad.at[:B].set(x.astype(jnp.float32))

        has_state = (h0 is not None) or (c0 is not None)
        h0_pad = c0_pad = None
        if has_state:
            if h0 is None:
                h0 = jnp.zeros((self.L, B, self.H), jnp.float32)
            if c0 is None:
                c0 = jnp.zeros((self.L, B, self.H), jnp.float32)
            h0_pad = jnp.zeros((self.L, BP, self.H), jnp.float32).at[:, :B].set(h0)
            c0_pad = jnp.zeros((self.L, BP, self.H), jnp.float32).at[:, :B].set(c0)

        logits = fused_forward(x_pad, self.embed_proj, self.layers,
                               h0_pad, c0_pad, self.fc_w_t, self.fc_b,
                               T=self.T, BP=BP, E=self.E, H=self.H, C=self.C)
        return logits[:B]

    def reference_forward(self, x, h0=None, c0=None):
        """Pure-JAX f32 reference (same math, no bf16 / gate folding / padding)."""
        B = x.shape[0]
        H, T, E, L = self.H, self.T, self.E, self.L
        emb = jnp.tanh(x.astype(jnp.float32) @ self._ref_proj).reshape(B, T, E)
        if h0 is None:
            h0 = jnp.zeros((L, B, H), jnp.float32)
        if c0 is None:
            c0 = jnp.zeros((L, B, H), jnp.float32)
        x_seq = emb
        h = None
        for l in range(L):
            w_ih, w_hh, b = self._ref_layers[l]
            h, c = h0[l], c0[l]
            outs = []
            for t in range(T):
                z = x_seq[:, t] @ w_ih.T + h @ w_hh.T + b
                i = jax.nn.sigmoid(z[:, 0 * H:1 * H])
                f = jax.nn.sigmoid(z[:, 1 * H:2 * H])
                g = jnp.tanh(z[:, 2 * H:3 * H])
                o = jax.nn.sigmoid(z[:, 3 * H:4 * H])
                c = f * c + i * g
                h = o * jnp.tanh(c)
                outs.append(h)
            x_seq = jnp.stack(outs, axis=1)
        return h @ self._ref_fc_w.T + self.fc_b


# ----------------------------------- main ----------------------------------- #

if __name__ == "__main__":
    B = 2             # batch
    context_len = 16  # raw time-series length fed to the (stubbed) embedder
    T = 8             # embedding sequence length
    E = 32            # embedding_dim
    H = 32            # hidden_size
    C = 4             # num_classes
    num_layers = 2

    key = jax.random.PRNGKey(0)
    k_model, k_x = jax.random.split(key)

    model = LSTMClassifierPallas(E, H, C, num_layers, context_len, T, k_model)
    x = jax.random.normal(k_x, (B, context_len), jnp.float32)

    logits = model(x)
    jax.block_until_ready(logits)
    assert logits.shape == (B, C)

    # Numerical sanity check vs. the pure-JAX f32 reference (kernel uses bf16
    # matmul operands, hence loose tolerance).
    ref = model.reference_forward(x)
    assert jnp.allclose(logits, ref, atol=1e-1, rtol=1e-1), \
        float(jnp.max(jnp.abs(logits - ref)))

    print("KERNEL_OK")
</pallas_src>

<mosaic_0001>
module attributes {stable_mosaic.version = 11 : i64} {
  func.func @kernel(%arg0: memref<8x16xf32, #tpu.memory_space<vmem>>, %arg1: memref<16x256xbf16, #tpu.memory_space<vmem>>, %arg2: memref<32x128xbf16, #tpu.memory_space<vmem>>, %arg3: memref<32x128xbf16, #tpu.memory_space<vmem>>, %arg4: memref<1x128xf32, #tpu.memory_space<vmem>>, %arg5: memref<32x128xbf16, #tpu.memory_space<vmem>>, %arg6: memref<32x128xbf16, #tpu.memory_space<vmem>>, %arg7: memref<1x128xf32, #tpu.memory_space<vmem>>, %arg8: memref<32x4xbf16, #tpu.memory_space<vmem>>, %arg9: memref<1x4xf32, #tpu.memory_space<vmem>>, %arg10: memref<8x4xf32, #tpu.memory_space<vmem>>) attributes {dimension_semantics = [], scalar_prefetch = 0 : i64, scratch_operands = 0 : i64, tpu.core_type = #tpu.core_type<tc>} {
    %c0 = arith.constant 0 : index
    %c0_0 = arith.constant 0 : index
    %0 = vector.load %arg0[%c0, %c0_0] : memref<8x16xf32, #tpu.memory_space<vmem>>, vector<8x16xf32>
    %1 = arith.truncf %0 : vector<8x16xf32> to vector<8x16xbf16>
    %c0_1 = arith.constant 0 : index
    %c0_2 = arith.constant 0 : index
    %2 = vector.load %arg1[%c0_1, %c0_2] : memref<16x256xbf16, #tpu.memory_space<vmem>>, vector<16x256xbf16>
    %cst = arith.constant dense<0.000000e+00> : vector<8x256xf32>
    %3 = tpu.matmul %1, %2, %cst {dimension_numbers = #tpu.dot_dimension_numbers<[1], [0], [0], [1], [0, 0, 1, 1], [], []>} : vector<8x16xbf16>, vector<16x256xbf16>, vector<8x256xf32> -> vector<8x256xf32>
    %4 = math.tanh %3 : vector<8x256xf32>
    %5 = tpu.iota {dimensions = array<i32: 1>} : vector<8x128xi32>
    %c64_i32 = arith.constant 64 : i32
    %6 = vector.broadcast %c64_i32 : i32 to vector<8x128xi32>
    %7 = arith.cmpi sge, %5, %6 : vector<8x128xi32>
    %c96_i32 = arith.constant 96 : i32
    %8 = vector.broadcast %c96_i32 : i32 to vector<8x128xi32>
    %9 = arith.cmpi slt, %5, %8 : vector<8x128xi32>
    %10 = arith.andi %7, %9 : vector<8x128xi1>
    %11 = vector.extract_strided_slice %4 {offsets = [0, 0], sizes = [8, 32], strides = [1, 1]} : vector<8x256xf32> to vector<8x32xf32>
    %12 = vector.extract_strided_slice %4 {offsets = [0, 32], sizes = [8, 32], strides = [1, 1]} : vector<8x256xf32> to vector<8x32xf32>
    %13 = vector.extract_strided_slice %4 {offsets = [0, 64], sizes = [8, 32], strides = [1, 1]} : vector<8x256xf32> to vector<8x32xf32>
    %14 = vector.extract_strided_slice %4 {offsets = [0, 96], sizes = [8, 32], strides = [1, 1]} : vector<8x256xf32> to vector<8x32xf32>
    %15 = vector.extract_strided_slice %4 {offsets = [0, 128], sizes = [8, 32], strides = [1, 1]} : vector<8x256xf32> to vector<8x32xf32>
    %16 = vector.extract_strided_slice %4 {offsets = [0, 160], sizes = [8, 32], strides = [1, 1]} : vector<8x256xf32> to vector<8x32xf32>
    %17 = vector.extract_strided_slice %4 {offsets = [0, 192], sizes = [8, 32], strides = [1, 1]} : vector<8x256xf32> to vector<8x32xf32>
    %18 = vector.extract_strided_slice %4 {offsets = [0, 224], sizes = [8, 32], strides = [1, 1]} : vector<8x256xf32> to vector<8x32xf32>
    %c0_3 = arith.constant 0 : index
    %c0_4 = arith.constant 0 : index
    %19 = vector.load %arg2[%c0_3, %c0_4] : memref<32x128xbf16, #tpu.memory_space<vmem>>, vector<32x128xbf16>
    %c0_5 = arith.constant 0 : index
    %c0_6 = arith.constant 0 : index
    %20 = vector.load %arg3[%c0_5, %c0_6] : memref<32x128xbf16, #tpu.memory_space<vmem>>, vector<32x128xbf16>
    %c0_7 = arith.constant 0 : index
    %c0_8 = arith.constant 0 : index
    %21 = vector.load %arg4[%c0_7, %c0_8] : memref<1x128xf32, #tpu.memory_space<vmem>>, vector<1x128xf32>
    %22 = tpu.concatenate %11, %12, %13, %14, %15, %16, %17, %18 in 0 : vector<8x32xf32>, vector<8x32xf32>, vector<8x32xf32>, vector<8x32xf32>, vector<8x32xf32>, vector<8x32xf32>, vector<8x32xf32>, vector<8x32xf32> -> vector<64x32xf32>
    %23 = arith.truncf %22 : vector<64x32xf32> to vector<64x32xbf16>
    %cst_9 = arith.constant dense<0.000000e+00> : vector<64x128xf32>
    %24 = tpu.matmul %23, %19, %cst_9 {dimension_numbers = #tpu.dot_dimension_numbers<[1], [0], [0], [1], [0, 0, 1, 1], [], []>} : vector<64x32xbf16>, vector<32x128xbf16>, vector<64x128xf32> -> vector<64x128xf32>
    %25 = vector.broadcast %21 : vector<1x128xf32> to vector<64x128xf32>
    %26 = arith.addf %24, %25 : vector<64x128xf32>
    %cst_10 = arith.constant 0.000000e+00 : f32
    %27 = vector.broadcast %cst_10 : f32 to vector<8x32xf32>
    %cst_11 = arith.constant 0.000000e+00 : f32
    %28 = vector.broadcast %cst_11 : f32 to vector<8x32xf32>
    %29 = vector.extract_strided_slice %26 {offsets = [0, 0], sizes = [8, 128], strides = [1, 1]} : vector<64x128xf32> to vector<8x128xf32>
    %30 = arith.truncf %27 : vector<8x32xf32> to vector<8x32xbf16>
    %cst_12 = arith.constant dense<0.000000e+00> : vector<8x128xf32>
    %31 = tpu.matmul %30, %20, %cst_12 {dimension_numbers = #tpu.dot_dimension_numbers<[1], [0], [0], [1], [0, 0, 1, 1], [], []>} : vector<8x32xbf16>, vector<32x128xbf16>, vector<8x128xf32> -> vector<8x128xf32>
    %32 = arith.addf %29, %31 : vector<8x128xf32>
    %33 = arith.negf %32 : vector<8x128xf32>
    %34 = math.exp %33 : vector<8x128xf32>
    %cst_13 = arith.constant 1.000000e+00 : f32
    %35 = vector.broadcast %cst_13 : f32 to vector<8x128xf32>
    %36 = arith.addf %35, %34 : vector<8x128xf32>
    %37 = arith.divf %35, %36 : vector<8x128xf32>
    %cst_14 = arith.constant 2.000000e+00 : f32
    %38 = vector.broadcast %cst_14 : f32 to vector<8x128xf32>
    %39 = arith.mulf %38, %37 : vector<8x128xf32>
    %cst_15 = arith.constant 1.000000e+00 : f32
    %40 = vector.broadcast %cst_15 : f32 to vector<8x128xf32>
    %41 = arith.subf %39, %40 : vector<8x128xf32>
    %42 = arith.select %10, %41, %37 : vector<8x128xi1>, vector<8x128xf32>
    %43 = vector.extract_strided_slice %42 {offsets = [0, 0], sizes = [8, 32], strides = [1, 1]} : vector<8x128xf32> to vector<8x32xf32>
    %44 = vector.extract_strided_slice %42 {offsets = [0, 32], sizes = [8, 32], strides = [1, 1]} : vector<8x128xf32> to vector<8x32xf32>
    %45 = vector.extract_strided_slice %42 {offsets = [0, 64], sizes = [8, 32], strides = [1, 1]} : vector<8x128xf32> to vector<8x32xf32>
    %46 = vector.extract_strided_slice %42 {offsets = [0, 96], sizes = [8, 32], strides = [1, 1]} : vector<8x128xf32> to vector<8x32xf32>
    %47 = arith.mulf %44, %28 : vector<8x32xf32>
    %48 = arith.mulf %43, %45 : vector<8x32xf32>
    %49 = arith.addf %47, %48 : vector<8x32xf32>
    %50 = math.tanh %49 : vector<8x32xf32>
    %51 = arith.mulf %46, %50 : vector<8x32xf32>
    %52 = vector.extract_strided_slice %26 {offsets = [8, 0], sizes = [8, 128], strides = [1, 1]} : vector<64x128xf32> to vector<8x128xf32>
    %53 = arith.truncf %51 : vector<8x32xf32> to vector<8x32xbf16>
    %cst_16 = arith.constant dense<0.000000e+00> : vector<8x128xf32>
    %54 = tpu.matmul %53, %20, %cst_16 {dimension_numbers = #tpu.dot_dimension_numbers<[1], [0], [0], [1], [0, 0, 1, 1], [], []>} : vector<8x32xbf16>, vector<32x128xbf16>, vector<8x128xf32> -> vector<8x128xf32>
    %55 = arith.addf %52, %54 : vector<8x128xf32>
    %56 = arith.negf %55 : vector<8x128xf32>
    %57 = math.exp %56 : vector<8x128xf32>
    %cst_17 = arith.constant 1.000000e+00 : f32
    %58 = vector.broadcast %cst_17 : f32 to vector<8x128xf32>
    %59 = arith.addf %58, %57 : vector<8x128xf32>
    %60 = arith.divf %58, %59 : vector<8x128xf32>
    %cst_18 = arith.constant 2.000000e+00 : f32
    %61 = vector.broadcast %cst_18 : f32 to vector<8x128xf32>
    %62 = arith.mulf %61, %60 : vector<8x128xf32>
    %cst_19 = arith.constant 1.000000e+00 : f32
    %63 = vector.broadcast %cst_19 : f32 to vector<8x128xf32>
    %64 = arith.subf %62, %63 : vector<8x128xf32>
    %65 = arith.select %10, %64, %60 : vector<8x128xi1>, vector<8x128xf32>
    %66 = vector.extract_strided_slice %65 {offsets = [0, 0], sizes = [8, 32], strides = [1, 1]} : vector<8x128xf32> to vector<8x32xf32>
    %67 = vector.extract_strided_slice %65 {offsets = [0, 32], sizes = [8, 32], strides = [1, 1]} : vector<8x128xf32> to vector<8x32xf32>
    %68 = vector.extract_strided_slice %65 {offsets = [0, 64], sizes = [8, 32], strides = [1, 1]} : vector<8x128xf32> to vector<8x32xf32>
    %69 = vector.extract_strided_slice %65 {offsets = [0, 96], sizes = [8, 32], strides = [1, 1]} : vector<8x128xf32> to vector<8x32xf32>
    %70 = arith.mulf %67, %49 : vector<8x32xf32>
    %71 = arith.mulf %66, %68 : vector<8x32xf32>
    %72 = arith.addf %70, %71 : vector<8x32xf32>
    %73 = math.tanh %72 : vector<8x32xf32>
    %74 = arith.mulf %69, %73 : vector<8x32xf32>
    %75 = vector.extract_strided_slice %26 {offsets = [16, 0], sizes = [8, 128], strides = [1, 1]} : vector<64x128xf32> to vector<8x128xf32>
    %76 = arith.truncf %74 : vector<8x32xf32> to vector<8x32xbf16>
    %cst_20 = arith.constant dense<0.000000e+00> : vector<8x128xf32>
    %77 = tpu.matmul %76, %20, %cst_20 {dimension_numbers = #tpu.dot_dimension_numbers<[1], [0], [0], [1], [0, 0, 1, 1], [], []>} : vector<8x32xbf16>, vector<32x128xbf16>, vector<8x128xf32> -> vector<8x128xf32>
    %78 = arith.addf %75, %77 : vector<8x128xf32>
    %79 = arith.negf %78 : vector<8x128xf32>
    %80 = math.exp %79 : vector<8x128xf32>
    %cst_21 = arith.constant 1.000000e+00 : f32
    %81 = vector.broadcast %cst_21 : f32 to vector<8x128xf32>
    %82 = arith.addf %81, %80 : vector<8x128xf32>
    %83 = arith.divf %81, %82 : vector<8x128xf32>
    %cst_22 = arith.constant 2.000000e+00 : f32
    %84 = vector.broadcast %cst_22 : f32 to vector<8x128xf32>
    %85 = arith.mulf %84, %83 : vector<8x128xf32>
    %cst_23 = arith.constant 1.000000e+00 : f32
    %86 = vector.broadcast %cst_23 : f32 to vector<8x128xf32>
    %87 = arith.subf %85, %86 : vector<8x128xf32>
    %88 = arith.select %10, %87, %83 : vector<8x128xi1>, vector<8x128xf32>
    %89 = vector.extract_strided_slice %88 {offsets = [0, 0], sizes = [8, 32], strides = [1, 1]} : vector<8x128xf32> to vector<8x32xf32>
    %90 = vector.extract_strided_slice %88 {offsets = [0, 32], sizes = [8, 32], strides = [1, 1]} : vector<8x128xf32> to vector<8x32xf32>
    %91 = vector.extract_strided_slice %88 {offsets = [0, 64], sizes = [8, 32], strides = [1, 1]} : vector<8x128xf32> to vector<8x32xf32>
    %92 = vector.extract_strided_slice %88 {offsets = [0, 96], sizes = [8, 32], strides = [1, 1]} : vector<8x128xf32> to vector<8x32xf32>
    %93 = arith.mulf %90, %72 : vector<8x32xf32>
    %94 = arith.mulf %89, %91 : vector<8x32xf32>
    %95 = arith.addf %93, %94 : vector<8x32xf32>
    %96 = math.tanh %95 : vector<8x32xf32>
    %97 = arith.mulf %92, %96 : vector<8x32xf32>
    %98 = vector.extract_strided_slice %26 {offsets = [24, 0], sizes = [8, 128], strides = [1, 1]} : vector<64x128xf32> to vector<8x128xf32>
    %99 = arith.truncf %97 : vector<8x32xf32> to vector<8x32xbf16>
    %cst_24 = arith.constant dense<0.000000e+00> : vector<8x128xf32>
    %100 = tpu.matmul %99, %20, %cst_24 {dimension_numbers = #tpu.dot_dimension_numbers<[1], [0], [0], [1], [0, 0, 1, 1], [], []>} : vector<8x32xbf16>, vector<32x128xbf16>, vector<8x128xf32> -> vector<8x128xf32>
    %101 = arith.addf %98, %100 : vector<8x128xf32>
    %102 = arith.negf %101 : vector<8x128xf32>
    %103 = math.exp %102 : vector<8x128xf32>
    %cst_25 = arith.constant 1.000000e+00 : f32
    %104 = vector.broadcast %cst_25 : f32 to vector<8x128xf32>
    %105 = arith.addf %104, %103 : vector<8x128xf32>
    %106 = arith.divf %104, %105 : vector<8x128xf32>
    %cst_26 = arith.constant 2.000000e+00 : f32
    %107 = vector.broadcast %cst_26 : f32 to vector<8x128xf32>
    %108 = arith.mulf %107, %106 : vector<8x128xf32>
    %cst_27 = arith.constant 1.000000e+00 : f32
    %109 = vector.broadcast %cst_27 : f32 to vector<8x128xf32>
    %110 = arith.subf %108, %109 : vector<8x128xf32>
    %111 = arith.select %10, %110, %106 : vector<8x128xi1>, vector<8x128xf32>
    %112 = vector.extract_strided_slice %111 {offsets = [0, 0], sizes = [8, 32], strides = [1, 1]} : vector<8x128xf32> to vector<8x32xf32>
    %113 = vector.extract_strided_slice %111 {offsets = [0, 32], sizes = [8, 32], strides = [1, 1]} : vector<8x128xf32> to vector<8x32xf32>
    %114 = vector.extract_strided_slice %111 {offsets = [0, 64], sizes = [8, 32], strides = [1, 1]} : vector<8x128xf32> to vector<8x32xf32>
    %115 = vector.extract_strided_slice %111 {offsets = [0, 96], sizes = [8, 32], strides = [1, 1]} : vector<8x128xf32> to vector<8x32xf32>
    %116 = arith.mulf %113, %95 : vector<8x32xf32>
    %117 = arith.mulf %112, %114 : vector<8x32xf32>
    %118 = arith.addf %116, %117 : vector<8x32xf32>
    %119 = math.tanh %118 : vector<8x32xf32>
    %120 = arith.mulf %115, %119 : vector<8x32xf32>
    %121 = vector.extract_strided_slice %26 {offsets = [32, 0], sizes = [8, 128], strides = [1, 1]} : vector<64x128xf32> to vector<8x128xf32>
    %122 = arith.truncf %120 : vector<8x32xf32> to vector<8x32xbf16>
    %cst_28 = arith.constant dense<0.000000e+00> : vector<8x128xf32>
    %123 = tpu.matmul %122, %20, %cst_28 {dimension_numbers = #tpu.dot_dimension_numbers<[1], [0], [0], [1], [0, 0, 1, 1], [], []>} : vector<8x32xbf16>, vector<32x128xbf16>, vector<8x128xf32> -> vector<8x128xf32>
    %124 = arith.addf %121, %123 : vector<8x128xf32>
    %125 = arith.negf %124 : vector<8x128xf32>
    %126 = math.exp %125 : vector<8x128xf32>
    %cst_29 = arith.constant 1.000000e+00 : f32
    %127 = vector.broadcast %cst_29 : f32 to vector<8x128xf32>
    %128 = arith.addf %127, %126 : vector<8x128xf32>
    %129 = arith.divf %127, %128 : vector<8x128xf32>
    %cst_30 = arith.constant 2.000000e+00 : f32
    %130 = vector.broadcast %cst_30 : f32 to vector<8x128xf32>
    %131 = arith.mulf %130, %129 : vector<8x128xf32>
    %cst_31 = arith.constant 1.000000e+00 : f32
    %132 = vector.broadcast %cst_31 : f32 to vector<8x128xf32>
    %133 = arith.subf %131, %132 : vector<8x128xf32>
    %134 = arith.select %10, %133, %129 : vector<8x128xi1>, vector<8x128xf32>
    %135 = vector.extract_strided_slice %134 {offsets = [0, 0], sizes = [8, 32], strides = [1, 1]} : vector<8x128xf32> to vector<8x32xf32>
    %136 = vector.extract_strided_slice %134 {offsets = [0, 32], sizes = [8, 32], strides = [1, 1]} : vector<8x128xf32> to vector<8x32xf32>
    %137 = vector.extract_strided_slice %134 {offsets = [0, 64], sizes = [8, 32], strides = [1, 1]} : vector<8x128xf32> to vector<8x32xf32>
    %138 = vector.extract_strided_slice %134 {offsets = [0, 96], sizes = [8, 32], strides = [1, 1]} : vector<8x128xf32> to vector<8x32xf32>
    %139 = arith.mulf %136, %118 : vector<8x32xf32>
    %140 = arith.mulf %135, %137 : vector<8x32xf32>
    %141 = arith.addf %139, %140 : vector<8x32xf32>
    %142 = math.tanh %141 : vector<8x32xf32>
    %143 = arith.mulf %138, %142 : vector<8x32xf32>
    %144 = vector.extract_strided_slice %26 {offsets = [40, 0], sizes = [8, 128], strides = [1, 1]} : vector<64x128xf32> to vector<8x128xf32>
    %145 = arith.truncf %143 : vector<8x32xf32> to vector<8x32xbf16>
    %cst_32 = arith.constant dense<0.000000e+00> : vector<8x128xf32>
    %146 = tpu.matmul %145, %20, %cst_32 {dimension_numbers = #tpu.dot_dimension_numbers<[1], [0], [0], [1], [0, 0, 1, 1], [], []>} : vector<8x32xbf16>, vector<32x128xbf16>, vector<8x128xf32> -> vector<8x128xf32>
    %147 = arith.addf %144, %146 : vector<8x128xf32>
    %148 = arith.negf %147 : vector<8x128xf32>
    %149 = math.exp %148 : vector<8x128xf32>
    %cst_33 = arith.constant 1.000000e+00 : f32
    %150 = vector.broadcast %cst_33 : f32 to vector<8x128xf32>
    %151 = arith.addf %150, %149 : vector<8x128xf32>
    %152 = arith.divf %150, %151 : vector<8x128xf32>
    %cst_34 = arith.constant 2.000000e+00 : f32
    %153 = vector.broadcast %cst_34 : f32 to vector<8x128xf32>
    %154 = arith.mulf %153, %152 : vector<8x128xf32>
    %cst_35 = arith.constant 1.000000e+00 : f32
    %155 = vector.broadcast %cst_35 : f32 to vector<8x128xf32>
    %156 = arith.subf %154, %155 : vector<8x128xf32>
    %157 = arith.select %10, %156, %152 : vector<8x128xi1>, vector<8x128xf32>
    %158 = vector.extract_strided_slice %157 {offsets = [0, 0], sizes = [8, 32], strides = [1, 1]} : vector<8x128xf32> to vector<8x32xf32>
    %159 = vector.extract_strided_slice %157 {offsets = [0, 32], sizes = [8, 32], strides = [1, 1]} : vector<8x128xf32> to vector<8x32xf32>
    %160 = vector.extract_strided_slice %157 {offsets = [0, 64], sizes = [8, 32], strides = [1, 1]} : vector<8x128xf32> to vector<8x32xf32>
    %161 = vector.extract_strided_slice %157 {offsets = [0, 96], sizes = [8, 32], strides = [1, 1]} : vector<8x128xf32> to vector<8x32xf32>
    %162 = arith.mulf %159, %141 : vector<8x32xf32>
    %163 = arith.mulf %158, %160 : vector<8x32xf32>
    %164 = arith.addf %162, %163 : vector<8x32xf32>
    %165 = math.tanh %164 : vector<8x32xf32>
    %166 = arith.mulf %161, %165 : vector<8x32xf32>
    %167 = vector.extract_strided_slice %26 {offsets = [48, 0], sizes = [8, 128], strides = [1, 1]} : vector<64x128xf32> to vector<8x128xf32>
    %168 = arith.truncf %166 : vector<8x32xf32> to vector<8x32xbf16>
    %cst_36 = arith.constant dense<0.000000e+00> : vector<8x128xf32>
    %169 = tpu.matmul %168, %20, %cst_36 {dimension_numbers = #tpu.dot_dimension_numbers<[1], [0], [0], [1], [0, 0, 1, 1], [], []>} : vector<8x32xbf16>, vector<32x128xbf16>, vector<8x128xf32> -> vector<8x128xf32>
    %170 = arith.addf %167, %169 : vector<8x128xf32>
    %171 = arith.negf %170 : vector<8x128xf32>
    %172 = math.exp %171 : vector<8x128xf32>
    %cst_37 = arith.constant 1.000000e+00 : f32
    %173 = vector.broadcast %cst_37 : f32 to vector<8x128xf32>
    %174 = arith.addf %173, %172 : vector<8x128xf32>
    %175 = arith.divf %173, %174 : vector<8x128xf32>
    %cst_38 = arith.constant 2.000000e+00 : f32
    %176 = vector.broadcast %cst_38 : f32 to vector<8x128xf32>
    %177 = arith.mulf %176, %175 : vector<8x128xf32>
    %cst_39 = arith.constant 1.000000e+00 : f32
    %178 = vector.broadcast %cst_39 : f32 to vector<8x128xf32>
    %179 = arith.subf %177, %178 : vector<8x128xf32>
    %180 = arith.select %10, %179, %175 : vector<8x128xi1>, vector<8x128xf32>
    %181 = vector.extract_strided_slice %180 {offsets = [0, 0], sizes = [8, 32], strides = [1, 1]} : vector<8x128xf32> to vector<8x32xf32>
    %182 = vector.extract_strided_slice %180 {offsets = [0, 32], sizes = [8, 32], strides = [1, 1]} : vector<8x128xf32> to vector<8x32xf32>
    %183 = vector.extract_strided_slice %180 {offsets = [0, 64], sizes = [8, 32], strides = [1, 1]} : vector<8x128xf32> to vector<8x32xf32>
    %184 = vector.extract_strided_slice %180 {offsets = [0, 96], sizes = [8, 32], strides = [1, 1]} : vector<8x128xf32> to vector<8x32xf32>
    %185 = arith.mulf %182, %164 : vector<8x32xf32>
    %186 = arith.mulf %181, %183 : vector<8x32xf32>
    %187 = arith.addf %185, %186 : vector<8x32xf32>
    %188 = math.tanh %187 : vector<8x32xf32>
    %189 = arith.mulf %184, %188 : vector<8x32xf32>
    %190 = vector.extract_strided_slice %26 {offsets = [56, 0], sizes = [8, 128], strides = [1, 1]} : vector<64x128xf32> to vector<8x128xf32>
    %191 = arith.truncf %189 : vector<8x32xf32> to vector<8x32xbf16>
    %cst_40 = arith.constant dense<0.000000e+00> : vector<8x128xf32>
    %192 = tpu.matmul %191, %20, %cst_40 {dimension_numbers = #tpu.dot_dimension_numbers<[1], [0], [0], [1], [0, 0, 1, 1], [], []>} : vector<8x32xbf16>, vector<32x128xbf16>, vector<8x128xf32> -> vector<8x128xf32>
    %193 = arith.addf %190, %192 : vector<8x128xf32>
    %194 = arith.negf %193 : vector<8x128xf32>
    %195 = math.exp %194 : vector<8x128xf32>
    %cst_41 = arith.constant 1.000000e+00 : f32
    %196 = vector.broadcast %cst_41 : f32 to vector<8x128xf32>
    %197 = arith.addf %196, %195 : vector<8x128xf32>
    %198 = arith.divf %196, %197 : vector<8x128xf32>
    %cst_42 = arith.constant 2.000000e+00 : f32
    %199 = vector.broadcast %cst_42 : f32 to vector<8x128xf32>
    %200 = arith.mulf %199, %198 : vector<8x128xf32>
    %cst_43 = arith.constant 1.000000e+00 : f32
    %201 = vector.broadcast %cst_43 : f32 to vector<8x128xf32>
    %202 = arith.subf %200, %201 : vector<8x128xf32>
    %203 = arith.select %10, %202, %198 : vector<8x128xi1>, vector<8x128xf32>
    %204 = vector.extract_strided_slice %203 {offsets = [0, 0], sizes = [8, 32], strides = [1, 1]} : vector<8x128xf32> to vector<8x32xf32>
    %205 = vector.extract_strided_slice %203 {offsets = [0, 32], sizes = [8, 32], strides = [1, 1]} : vector<8x128xf32> to vector<8x32xf32>
    %206 = vector.extract_strided_slice %203 {offsets = [0, 64], sizes = [8, 32], strides = [1, 1]} : vector<8x128xf32> to vector<8x32xf32>
    %207 = vector.extract_strided_slice %203 {offsets = [0, 96], sizes = [8, 32], strides = [1, 1]} : vector<8x128xf32> to vector<8x32xf32>
    %208 = arith.mulf %205, %187 : vector<8x32xf32>
    %209 = arith.mulf %204, %206 : vector<8x32xf32>
    %210 = arith.addf %208, %209 : vector<8x32xf32>
    %211 = math.tanh %210 : vector<8x32xf32>
    %212 = arith.mulf %207, %211 : vector<8x32xf32>
    %c0_44 = arith.constant 0 : index
    %c0_45 = arith.constant 0 : index
    %213 = vector.load %arg5[%c0_44, %c0_45] : memref<32x128xbf16, #tpu.memory_space<vmem>>, vector<32x128xbf16>
    %c0_46 = arith.constant 0 : index
    %c0_47 = arith.constant 0 : index
    %214 = vector.load %arg6[%c0_46, %c0_47] : memref<32x128xbf16, #tpu.memory_space<vmem>>, vector<32x128xbf16>
    %c0_48 = arith.constant 0 : index
    %c0_49 = arith.constant 0 : index
    %215 = vector.load %arg7[%c0_48, %c0_49] : memref<1x128xf32, #tpu.memory_space<vmem>>, vector<1x128xf32>
    %216 = tpu.concatenate %51, %74, %97, %120, %143, %166, %189, %212 in 0 : vector<8x32xf32>, vector<8x32xf32>, vector<8x32xf32>, vector<8x32xf32>, vector<8x32xf32>, vector<8x32xf32>, vector<8x32xf32>, vector<8x32xf32> -> vector<64x32xf32>
    %217 = arith.truncf %216 : vector<64x32xf32> to vector<64x32xbf16>
    %cst_50 = arith.constant dense<0.000000e+00> : vector<64x128xf32>
    %218 = tpu.matmul %217, %213, %cst_50 {dimension_numbers = #tpu.dot_dimension_numbers<[1], [0], [0], [1], [0, 0, 1, 1], [], []>} : vector<64x32xbf16>, vector<32x128xbf16>, vector<64x128xf32> -> vector<64x128xf32>
    %219 = vector.broadcast %215 : vector<1x128xf32> to vector<64x128xf32>
    %220 = arith.addf %218, %219 : vector<64x128xf32>
    %cst_51 = arith.constant 0.000000e+00 : f32
    %221 = vector.broadcast %cst_51 : f32 to vector<8x32xf32>
    %cst_52 = arith.constant 0.000000e+00 : f32
    %222 = vector.broadcast %cst_52 : f32 to vector<8x32xf32>
    %223 = vector.extract_strided_slice %220 {offsets = [0, 0], sizes = [8, 128], strides = [1, 1]} : vector<64x128xf32> to vector<8x128xf32>
    %224 = arith.truncf %221 : vector<8x32xf32> to vector<8x32xbf16>
    %cst_53 = arith.constant dense<0.000000e+00> : vector<8x128xf32>
    %225 = tpu.matmul %224, %214, %cst_53 {dimension_numbers = #tpu.dot_dimension_numbers<[1], [0], [0], [1], [0, 0, 1, 1], [], []>} : vector<8x32xbf16>, vector<32x128xbf16>, vector<8x128xf32> -> vector<8x128xf32>
    %226 = arith.addf %223, %225 : vector<8x128xf32>
    %227 = arith.negf %226 : vector<8x128xf32>
    %228 = math.exp %227 : vector<8x128xf32>
    %cst_54 = arith.constant 1.000000e+00 : f32
    %229 = vector.broadcast %cst_54 : f32 to vector<8x128xf32>
    %230 = arith.addf %229, %228 : vector<8x128xf32>
    %231 = arith.divf %229, %230 : vector<8x128xf32>
    %cst_55 = arith.constant 2.000000e+00 : f32
    %232 = vector.broadcast %cst_55 : f32 to vector<8x128xf32>
    %233 = arith.mulf %232, %231 : vector<8x128xf32>
    %cst_56 = arith.constant 1.000000e+00 : f32
    %234 = vector.broadcast %cst_56 : f32 to vector<8x128xf32>
    %235 = arith.subf %233, %234 : vector<8x128xf32>
    %236 = arith.select %10, %235, %231 : vector<8x128xi1>, vector<8x128xf32>
    %237 = vector.extract_strided_slice %236 {offsets = [0, 0], sizes = [8, 32], strides = [1, 1]} : vector<8x128xf32> to vector<8x32xf32>
    %238 = vector.extract_strided_slice %236 {offsets = [0, 32], sizes = [8, 32], strides = [1, 1]} : vector<8x128xf32> to vector<8x32xf32>
    %239 = vector.extract_strided_slice %236 {offsets = [0, 64], sizes = [8, 32], strides = [1, 1]} : vector<8x128xf32> to vector<8x32xf32>
    %240 = vector.extract_strided_slice %236 {offsets = [0, 96], sizes = [8, 32], strides = [1, 1]} : vector<8x128xf32> to vector<8x32xf32>
    %241 = arith.mulf %238, %222 : vector<8x32xf32>
    %242 = arith.mulf %237, %239 : vector<8x32xf32>
    %243 = arith.addf %241, %242 : vector<8x32xf32>
    %244 = math.tanh %243 : vector<8x32xf32>
    %245 = arith.mulf %240, %244 : vector<8x32xf32>
    %246 = vector.extract_strided_slice %220 {offsets = [8, 0], sizes = [8, 128], strides = [1, 1]} : vector<64x128xf32> to vector<8x128xf32>
    %247 = arith.truncf %245 : vector<8x32xf32> to vector<8x32xbf16>
    %cst_57 = arith.constant dense<0.000000e+00> : vector<8x128xf32>
    %248 = tpu.matmul %247, %214, %cst_57 {dimension_numbers = #tpu.dot_dimension_numbers<[1], [0], [0], [1], [0, 0, 1, 1], [], []>} : vector<8x32xbf16>, vector<32x128xbf16>, vector<8x128xf32> -> vector<8x128xf32>
    %249 = arith.addf %246, %248 : vector<8x128xf32>
    %250 = arith.negf %249 : vector<8x128xf32>
    %251 = math.exp %250 : vector<8x128xf32>
    %cst_58 = arith.constant 1.000000e+00 : f32
    %252 = vector.broadcast %cst_58 : f32 to vector<8x128xf32>
    %253 = arith.addf %252, %251 : vector<8x128xf32>
    %254 = arith.divf %252, %253 : vector<8x128xf32>
    %cst_59 = arith.constant 2.000000e+00 : f32
    %255 = vector.broadcast %cst_59 : f32 to vector<8x128xf32>
    %256 = arith.mulf %255, %254 : vector<8x128xf32>
    %cst_60 = arith.constant 1.000000e+00 : f32
    %257 = vector.broadcast %cst_60 : f32 to vector<8x128xf32>
    %258 = arith.subf %256, %257 : vector<8x128xf32>
    %259 = arith.select %10, %258, %254 : vector<8x128xi1>, vector<8x128xf32>
    %260 = vector.extract_strided_slice %259 {offsets = [0, 0], sizes = [8, 32], strides = [1, 1]} : vector<8x128xf32> to vector<8x32xf32>
    %261 = vector.extract_strided_slice %259 {offsets = [0, 32], sizes = [8, 32], strides = [1, 1]} : vector<8x128xf32> to vector<8x32xf32>
    %262 = vector.extract_strided_slice %259 {offsets = [0, 64], sizes = [8, 32], strides = [1, 1]} : vector<8x128xf32> to vector<8x32xf32>
    %263 = vector.extract_strided_slice %259 {offsets = [0, 96], sizes = [8, 32], strides = [1, 1]} : vector<8x128xf32> to vector<8x32xf32>
    %264 = arith.mulf %261, %243 : vector<8x32xf32>
    %265 = arith.mulf %260, %262 : vector<8x32xf32>
    %266 = arith.addf %264, %265 : vector<8x32xf32>
    %267 = math.tanh %266 : vector<8x32xf32>
    %268 = arith.mulf %263, %267 : vector<8x32xf32>
    %269 = vector.extract_strided_slice %220 {offsets = [16, 0], sizes = [8, 128], strides = [1, 1]} : vector<64x128xf32> to vector<8x128xf32>
    %270 = arith.truncf %268 : vector<8x32xf32> to vector<8x32xbf16>
    %cst_61 = arith.constant dense<0.000000e+00> : vector<8x128xf32>
    %271 = tpu.matmul %270, %214, %cst_61 {dimension_numbers = #tpu.dot_dimension_numbers<[1], [0], [0], [1], [0, 0, 1, 1], [], []>} : vector<8x32xbf16>, vector<32x128xbf16>, vector<8x128xf32> -> vector<8x128xf32>
    %272 = arith.addf %269, %271 : vector<8x128xf32>
    %273 = arith.negf %272 : vector<8x128xf32>
    %274 = math.exp %273 : vector<8x128xf32>
    %cst_62 = arith.constant 1.000000e+00 : f32
    %275 = vector.broadcast %cst_62 : f32 to vector<8x128xf32>
    %276 = arith.addf %275, %274 : vector<8x128xf32>
    %277 = arith.divf %275, %276 : vector<8x128xf32>
    %cst_63 = arith.constant 2.000000e+00 : f32
    %278 = vector.broadcast %cst_63 : f32 to vector<8x128xf32>
    %279 = arith.mulf %278, %277 : vector<8x128xf32>
    %cst_64 = arith.constant 1.000000e+00 : f32
    %280 = vector.broadcast %cst_64 : f32 to vector<8x128xf32>
    %281 = arith.subf %279, %280 : vector<8x128xf32>
    %282 = arith.select %10, %281, %277 : vector<8x128xi1>, vector<8x128xf32>
    %283 = vector.extract_strided_slice %282 {offsets = [0, 0], sizes = [8, 32], strides = [1, 1]} : vector<8x128xf32> to vector<8x32xf32>
    %284 = vector.extract_strided_slice %282 {offsets = [0, 32], sizes = [8, 32], strides = [1, 1]} : vector<8x128xf32> to vector<8x32xf32>
    %285 = vector.extract_strided_slice %282 {offsets = [0, 64], sizes = [8, 32], strides = [1, 1]} : vector<8x128xf32> to vector<8x32xf32>
    %286 = vector.extract_strided_slice %282 {offsets = [0, 96], sizes = [8, 32], strides = [1, 1]} : vector<8x128xf32> to vector<8x32xf32>
    %287 = arith.mulf %284, %266 : vector<8x32xf32>
    %288 = arith.mulf %283, %285 : vector<8x32xf32>
    %289 = arith.addf %287, %288 : vector<8x32xf32>
    %290 = math.tanh %289 : vector<8x32xf32>
    %291 = arith.mulf %286, %290 : vector<8x32xf32>
    %292 = vector.extract_strided_slice %220 {offsets = [24, 0], sizes = [8, 128], strides = [1, 1]} : vector<64x128xf32> to vector<8x128xf32>
    %293 = arith.truncf %291 : vector<8x32xf32> to vector<8x32xbf16>
    %cst_65 = arith.constant dense<0.000000e+00> : vector<8x128xf32>
    %294 = tpu.matmul %293, %214, %cst_65 {dimension_numbers = #tpu.dot_dimension_numbers<[1], [0], [0], [1], [0, 0, 1, 1], [], []>} : vector<8x32xbf16>, vector<32x128xbf16>, vector<8x128xf32> -> vector<8x128xf32>
    %295 = arith.addf %292, %294 : vector<8x128xf32>
    %296 = arith.negf %295 : vector<8x128xf32>
    %297 = math.exp %296 : vector<8x128xf32>
    %cst_66 = arith.constant 1.000000e+00 : f32
    %298 = vector.broadcast %cst_66 : f32 to vector<8x128xf32>
    %299 = arith.addf %298, %297 : vector<8x128xf32>
    %300 = arith.divf %298, %299 : vector<8x128xf32>
    %cst_67 = arith.constant 2.000000e+00 : f32
    %301 = vector.broadcast %cst_67 : f32 to vector<8x128xf32>
    %302 = arith.mulf %301, %300 : vector<8x128xf32>
    %cst_68 = arith.constant 1.000000e+00 : f32
    %303 = vector.broadcast %cst_68 : f32 to vector<8x128xf32>
    %304 = arith.subf %302, %303 : vector<8x128xf32>
    %305 = arith.select %10, %304, %300 : vector<8x128xi1>, vector<8x128xf32>
    %306 = vector.extract_strided_slice %305 {offsets = [0, 0], sizes = [8, 32], strides = [1, 1]} : vector<8x128xf32> to vector<8x32xf32>
    %307 = vector.extract_strided_slice %305 {offsets = [0, 32], sizes = [8, 32], strides = [1, 1]} : vector<8x128xf32> to vector<8x32xf32>
    %308 = vector.extract_strided_slice %305 {offsets = [0, 64], sizes = [8, 32], strides = [1, 1]} : vector<8x128xf32> to vector<8x32xf32>
    %309 = vector.extract_strided_slice %305 {offsets = [0, 96], sizes = [8, 32], strides = [1, 1]} : vector<8x128xf32> to vector<8x32xf32>
    %310 = arith.mulf %307, %289 : vector<8x32xf32>
    %311 = arith.mulf %306, %308 : vector<8x32xf32>
    %312 = arith.addf %310, %311 : vector<8x32xf32>
    %313 = math.tanh %312 : vector<8x32xf32>
    %314 = arith.mulf %309, %313 : vector<8x32xf32>
    %315 = vector.extract_strided_slice %220 {offsets = [32, 0], sizes = [8, 128], strides = [1, 1]} : vector<64x128xf32> to vector<8x128xf32>
    %316 = arith.truncf %314 : vector<8x32xf32> to vector<8x32xbf16>
    %cst_69 = arith.constant dense<0.000000e+00> : vector<8x128xf32>
    %317 = tpu.matmul %316, %214, %cst_69 {dimension_numbers = #tpu.dot_dimension_numbers<[1], [0], [0], [1], [0, 0, 1, 1], [], []>} : vector<8x32xbf16>, vector<32x128xbf16>, vector<8x128xf32> -> vector<8x128xf32>
    %318 = arith.addf %315, %317 : vector<8x128xf32>
    %319 = arith.negf %318 : vector<8x128xf32>
    %320 = math.exp %319 : vector<8x128xf32>
    %cst_70 = arith.constant 1.000000e+00 : f32
    %321 = vector.broadcast %cst_70 : f32 to vector<8x128xf32>
    %322 = arith.addf %321, %320 : vector<8x128xf32>
    %323 = arith.divf %321, %322 : vector<8x128xf32>
    %cst_71 = arith.constant 2.000000e+00 : f32
    %324 = vector.broadcast %cst_71 : f32 to vector<8x128xf32>
    %325 = arith.mulf %324, %323 : vector<8x128xf32>
    %cst_72 = arith.constant 1.000000e+00 : f32
    %326 = vector.broadcast %cst_72 : f32 to vector<8x128xf32>
    %327 = arith.subf %325, %326 : vector<8x128xf32>
    %328 = arith.select %10, %327, %323 : vector<8x128xi1>, vector<8x128xf32>
    %329 = vector.extract_strided_slice %328 {offsets = [0, 0], sizes = [8, 32], strides = [1, 1]} : vector<8x128xf32> to vector<8x32xf32>
    %330 = vector.extract_strided_slice %328 {offsets = [0, 32], sizes = [8, 32], strides = [1, 1]} : vector<8x128xf32> to vector<8x32xf32>
    %331 = vector.extract_strided_slice %328 {offsets = [0, 64], sizes = [8, 32], strides = [1, 1]} : vector<8x128xf32> to vector<8x32xf32>
    %332 = vector.extract_strided_slice %328 {offsets = [0, 96], sizes = [8, 32], strides = [1, 1]} : vector<8x128xf32> to vector<8x32xf32>
    %333 = arith.mulf %330, %312 : vector<8x32xf32>
    %334 = arith.mulf %329, %331 : vector<8x32xf32>
    %335 = arith.addf %333, %334 : vector<8x32xf32>
    %336 = math.tanh %335 : vector<8x32xf32>
    %337 = arith.mulf %332, %336 : vector<8x32xf32>
    %338 = vector.extract_strided_slice %220 {offsets = [40, 0], sizes = [8, 128], strides = [1, 1]} : vector<64x128xf32> to vector<8x128xf32>
    %339 = arith.truncf %337 : vector<8x32xf32> to vector<8x32xbf16>
    %cst_73 = arith.constant dense<0.000000e+00> : vector<8x128xf32>
    %340 = tpu.matmul %339, %214, %cst_73 {dimension_numbers = #tpu.dot_dimension_numbers<[1], [0], [0], [1], [0, 0, 1, 1], [], []>} : vector<8x32xbf16>, vector<32x128xbf16>, vector<8x128xf32> -> vector<8x128xf32>
    %341 = arith.addf %338, %340 : vector<8x128xf32>
    %342 = arith.negf %341 : vector<8x128xf32>
    %343 = math.exp %342 : vector<8x128xf32>
    %cst_74 = arith.constant 1.000000e+00 : f32
    %344 = vector.broadcast %cst_74 : f32 to vector<8x128xf32>
    %345 = arith.addf %344, %343 : vector<8x128xf32>
    %346 = arith.divf %344, %345 : vector<8x128xf32>
    %cst_75 = arith.constant 2.000000e+00 : f32
    %347 = vector.broadcast %cst_75 : f32 to vector<8x128xf32>
    %348 = arith.mulf %347, %346 : vector<8x128xf32>
    %cst_76 = arith.constant 1.000000e+00 : f32
    %349 = vector.broadcast %cst_76 : f32 to vector<8x128xf32>
    %350 = arith.subf %348, %349 : vector<8x128xf32>
    %351 = arith.select %10, %350, %346 : vector<8x128xi1>, vector<8x128xf32>
    %352 = vector.extract_strided_slice %351 {offsets = [0, 0], sizes = [8, 32], strides = [1, 1]} : vector<8x128xf32> to vector<8x32xf32>
    %353 = vector.extract_strided_slice %351 {offsets = [0, 32], sizes = [8, 32], strides = [1, 1]} : vector<8x128xf32> to vector<8x32xf32>
    %354 = vector.extract_strided_slice %351 {offsets = [0, 64], sizes = [8, 32], strides = [1, 1]} : vector<8x128xf32> to vector<8x32xf32>
    %355 = vector.extract_strided_slice %351 {offsets = [0, 96], sizes = [8, 32], strides = [1, 1]} : vector<8x128xf32> to vector<8x32xf32>
    %356 = arith.mulf %353, %335 : vector<8x32xf32>
    %357 = arith.mulf %352, %354 : vector<8x32xf32>
    %358 = arith.addf %356, %357 : vector<8x32xf32>
    %359 = math.tanh %358 : vector<8x32xf32>
    %360 = arith.mulf %355, %359 : vector<8x32xf32>
    %361 = vector.extract_strided_slice %220 {offsets = [48, 0], sizes = [8, 128], strides = [1, 1]} : vector<64x128xf32> to vector<8x128xf32>
    %362 = arith.truncf %360 : vector<8x32xf32> to vector<8x32xbf16>
    %cst_77 = arith.constant dense<0.000000e+00> : vector<8x128xf32>
    %363 = tpu.matmul %362, %214, %cst_77 {dimension_numbers = #tpu.dot_dimension_numbers<[1], [0], [0], [1], [0, 0, 1, 1], [], []>} : vector<8x32xbf16>, vector<32x128xbf16>, vector<8x128xf32> -> vector<8x128xf32>
    %364 = arith.addf %361, %363 : vector<8x128xf32>
    %365 = arith.negf %364 : vector<8x128xf32>
    %366 = math.exp %365 : vector<8x128xf32>
    %cst_78 = arith.constant 1.000000e+00 : f32
    %367 = vector.broadcast %cst_78 : f32 to vector<8x128xf32>
    %368 = arith.addf %367, %366 : vector<8x128xf32>
    %369 = arith.divf %367, %368 : vector<8x128xf32>
    %cst_79 = arith.constant 2.000000e+00 : f32
    %370 = vector.broadcast %cst_79 : f32 to vector<8x128xf32>
    %371 = arith.mulf %370, %369 : vector<8x128xf32>
    %cst_80 = arith.constant 1.000000e+00 : f32
    %372 = vector.broadcast %cst_80 : f32 to vector<8x128xf32>
    %373 = arith.subf %371, %372 : vector<8x128xf32>
    %374 = arith.select %10, %373, %369 : vector<8x128xi1>, vector<8x128xf32>
    %375 = vector.extract_strided_slice %374 {offsets = [0, 0], sizes = [8, 32], strides = [1, 1]} : vector<8x128xf32> to vector<8x32xf32>
    %376 = vector.extract_strided_slice %374 {offsets = [0, 32], sizes = [8, 32], strides = [1, 1]} : vector<8x128xf32> to vector<8x32xf32>
    %377 = vector.extract_strided_slice %374 {offsets = [0, 64], sizes = [8, 32], strides = [1, 1]} : vector<8x128xf32> to vector<8x32xf32>
    %378 = vector.extract_strided_slice %374 {offsets = [0, 96], sizes = [8, 32], strides = [1, 1]} : vector<8x128xf32> to vector<8x32xf32>
    %379 = arith.mulf %376, %358 : vector<8x32xf32>
    %380 = arith.mulf %375, %377 : vector<8x32xf32>
    %381 = arith.addf %379, %380 : vector<8x32xf32>
    %382 = math.tanh %381 : vector<8x32xf32>
    %383 = arith.mulf %378, %382 : vector<8x32xf32>
    %384 = vector.extract_strided_slice %220 {offsets = [56, 0], sizes = [8, 128], strides = [1, 1]} : vector<64x128xf32> to vector<8x128xf32>
    %385 = arith.truncf %383 : vector<8x32xf32> to vector<8x32xbf16>
    %cst_81 = arith.constant dense<0.000000e+00> : vector<8x128xf32>
    %386 = tpu.matmul %385, %214, %cst_81 {dimension_numbers = #tpu.dot_dimension_numbers<[1], [0], [0], [1], [0, 0, 1, 1], [], []>} : vector<8x32xbf16>, vector<32x128xbf16>, vector<8x128xf32> -> vector<8x128xf32>
    %387 = arith.addf %384, %386 : vector<8x128xf32>
    %388 = arith.negf %387 : vector<8x128xf32>
    %389 = math.exp %388 : vector<8x128xf32>
    %cst_82 = arith.constant 1.000000e+00 : f32
    %390 = vector.broadcast %cst_82 : f32 to vector<8x128xf32>
    %391 = arith.addf %390, %389 : vector<8x128xf32>
    %392 = arith.divf %390, %391 : vector<8x128xf32>
    %cst_83 = arith.constant 2.000000e+00 : f32
    %393 = vector.broadcast %cst_83 : f32 to vector<8x128xf32>
    %394 = arith.mulf %393, %392 : vector<8x128xf32>
    %cst_84 = arith.constant 1.000000e+00 : f32
    %395 = vector.broadcast %cst_84 : f32 to vector<8x128xf32>
    %396 = arith.subf %394, %395 : vector<8x128xf32>
    %397 = arith.select %10, %396, %392 : vector<8x128xi1>, vector<8x128xf32>
    %398 = vector.extract_strided_slice %397 {offsets = [0, 0], sizes = [8, 32], strides = [1, 1]} : vector<8x128xf32> to vector<8x32xf32>
    %399 = vector.extract_strided_slice %397 {offsets = [0, 32], sizes = [8, 32], strides = [1, 1]} : vector<8x128xf32> to vector<8x32xf32>
    %400 = vector.extract_strided_slice %397 {offsets = [0, 64], sizes = [8, 32], strides = [1, 1]} : vector<8x128xf32> to vector<8x32xf32>
    %401 = vector.extract_strided_slice %397 {offsets = [0, 96], sizes = [8, 32], strides = [1, 1]} : vector<8x128xf32> to vector<8x32xf32>
    %402 = arith.mulf %399, %381 : vector<8x32xf32>
    %403 = arith.mulf %398, %400 : vector<8x32xf32>
    %404 = arith.addf %402, %403 : vector<8x32xf32>
    %405 = math.tanh %404 : vector<8x32xf32>
    %406 = arith.mulf %401, %405 : vector<8x32xf32>
    %407 = arith.truncf %406 : vector<8x32xf32> to vector<8x32xbf16>
    %c0_85 = arith.constant 0 : index
    %c0_86 = arith.constant 0 : index
    %408 = vector.load %arg8[%c0_85, %c0_86] : memref<32x4xbf16, #tpu.memory_space<vmem>>, vector<32x4xbf16>
    %cst_87 = arith.constant dense<0.000000e+00> : vector<8x4xf32>
    %409 = tpu.matmul %407, %408, %cst_87 {dimension_numbers = #tpu.dot_dimension_numbers<[1], [0], [0], [1], [0, 0, 1, 1], [], []>} : vector<8x32xbf16>, vector<32x4xbf16>, vector<8x4xf32> -> vector<8x4xf32>
    %c0_88 = arith.constant 0 : index
    %c0_89 = arith.constant 0 : index
    %410 = vector.load %arg9[%c0_88, %c0_89] : memref<1x4xf32, #tpu.memory_space<vmem>>, vector<1x4xf32>
    %411 = vector.broadcast %410 : vector<1x4xf32> to vector<8x4xf32>
    %412 = arith.addf %409, %411 : vector<8x4xf32>
    %c0_90 = arith.constant 0 : index
    %c0_91 = arith.constant 0 : index
    %413 = vector.load %arg10[%c0_90, %c0_91] : memref<8x4xf32, #tpu.memory_space<vmem>>, vector<8x4xf32>
    tpu.vector_store %arg10[%c0_90, %c0_91], %412 {strides = array<i32>} : memref<8x4xf32, #tpu.memory_space<vmem>>, vector<8x4xf32>,
    return
  }
}

</mosaic_0001>

<llo_original>
// kernel: tpu_custom_call.1
$region0: #{tpu_custom_call.1}
  #allocation0 [shape = 'u32[]', space=smem, size = 0x4, offset = 0x4, fixed_abs, tag = 'smem constant byte address 0x4 - core index']
  #allocation1 [shape = 'u32[144,128]{1,0:T(1,128)}', space=vmem, size = 0x12000, scoped, tag = 'internal scratch']
  %s0 = inlined_call_operand.hbm [shape: f32[8,16], index: 0, kind: input, shape index: {}]
  %s1 = inlined_call_operand.vmem [shape: bf16[16,256], index: 1, kind: input, shape index: {}]
  %s2 = inlined_call_operand.hbm [shape: bf16[32,128], index: 2, kind: input, shape index: {}]
  %s3 = inlined_call_operand.hbm [shape: bf16[32,128], index: 3, kind: input, shape index: {}]
  %s4 = inlined_call_operand.vmem [shape: f32[1,128], index: 4, kind: input, shape index: {}]
  %s5 = inlined_call_operand.vmem [shape: bf16[32,128], index: 5, kind: input, shape index: {}]
  %s6 = inlined_call_operand.hbm [shape: bf16[32,128], index: 6, kind: input, shape index: {}]
  %s7 = inlined_call_operand.vmem [shape: f32[1,128], index: 7, kind: input, shape index: {}]
  %s8 = inlined_call_operand.vmem [shape: bf16[32,4], index: 8, kind: input, shape index: {}]
  %s9 = inlined_call_operand.vmem [shape: f32[1,4], index: 9, kind: input, shape index: {}]
  %s10 = inlined_call_operand.vmem [shape: f32[8,4], index: 10, kind: output, shape index: {}]
  %s11 = sld [smem:[#allocation0]]
  $region66: #{tpu_custom_call.1} parent=0
    _
  %s13 = ssub.s32 1, %s11
  %s14 = scalar_select 0, %s13, %s11
  $region1: #{tpu_custom_call.1} parent=0
    #allocation2 [shape = 'u8[4096]{0}', space=vmem, size = 0x1000, scoped, tag = 'input window, operand 0, single buffered']
    #allocation3 [shape = 's32[1]{0}', space=sflag, size = 0x4, scoped, tag = 'scoped memory for tpu_custom_call.1']
    #allocation4 [shape = 'u8[8192]{0}', space=vmem, size = 0x2000, scoped, tag = 'input window, operand 2, single buffered']
    #allocation5 [shape = 's32[1]{0}', space=sflag, size = 0x4, scoped, tag = 'scoped memory for tpu_custom_call.1']
    #allocation6 [shape = 'u8[8192]{0}', space=vmem, size = 0x2000, scoped, tag = 'input window, operand 3, single buffered']
    #allocation7 [shape = 'u8[8192]{0}', space=vmem, size = 0x2000, scoped, tag = 'input window, operand 6, single buffered']
    #allocation8 [shape = 's32[1]{0}', space=sflag, size = 0x4, scoped, tag = 'scoped memory for tpu_custom_call.1']
    %15 = vsyncpa [#allocation3], 0
    %16 = vsyncpa [#allocation5], 0
    %17 = vsyncpa [#allocation8], 0
    // Predicated region
    $region2: #{tpu_custom_call.1} parent=1 // pred_check
      _
    $region3: #{tpu_custom_call.1} parent=1 // pred_check_branch
      %19 = sbr.rel (0) target = $region5
    $region4: #{tpu_custom_call.1} parent=1 // pred_region
      %s21 = ssub.s32 128, 128
      %22 = vsyncadd [#allocation3], %s21
      %s24 = sshll.u32 [#allocation2], 4
      %s25 = int_to_ptr.vmem [resolvable:$true] %s24
      %27 = dma.hbm_to_vmem [thread:$0]  %s0, 128, %s25, [#allocation3]
    $region5: #{tpu_custom_call.1} parent=1 // pred_fallthru
      _
    // Predicated region
    $region6: #{tpu_custom_call.1} parent=1 // pred_check
      _
    $region7: #{tpu_custom_call.1} parent=1 // pred_check_branch
      %29 = sbr.rel (0) target = $region9
    $region8: #{tpu_custom_call.1} parent=1 // pred_region
      _
    $region9: #{tpu_custom_call.1} parent=1 // pred_fallthru
      _
    // Predicated region
    $region10: #{tpu_custom_call.1} parent=1 // pred_check
      _
    $region11: #{tpu_custom_call.1} parent=1 // pred_check_branch
      %31 = sbr.rel (0) target = $region13
    $region12: #{tpu_custom_call.1} parent=1 // pred_region
      %s33 = ssub.s32 256, 256
      %34 = vsyncadd [#allocation5], %s33
      %s35 = sshll.u32 [#allocation4], 4
      %s36 = int_to_ptr.vmem [resolvable:$true] %s35
      %41 = dma.hbm_to_vmem [thread:$0]  %s2, 256, %s36, [#allocation5], 64, 64, 4
    $region13: #{tpu_custom_call.1} parent=1 // pred_fallthru
      _
    // Predicated region
    $region14: #{tpu_custom_call.1} parent=1 // pred_check
      _
    $region15: #{tpu_custom_call.1} parent=1 // pred_check_branch
      %43 = sbr.rel (0) target = $region17
    $region16: #{tpu_custom_call.1} parent=1 // pred_region
      %s45 = ssub.s32 256, 256
      %46 = vsyncadd [#allocation5], %s45
      %s47 = sshll.u32 [#allocation6], 4
      %s48 = int_to_ptr.vmem [resolvable:$true] %s47
      %53 = dma.hbm_to_vmem [thread:$0]  %s3, 256, %s48, [#allocation5], 64, 64, 4
    $region17: #{tpu_custom_call.1} parent=1 // pred_fallthru
      _
    // Predicated region
    $region18: #{tpu_custom_call.1} parent=1 // pred_check
      _
    $region19: #{tpu_custom_call.1} parent=1 // pred_check_branch
      %55 = sbr.rel (0) target = $region21
    $region20: #{tpu_custom_call.1} parent=1 // pred_region
      _
    $region21: #{tpu_custom_call.1} parent=1 // pred_fallthru
      _
    // Predicated region
    $region22: #{tpu_custom_call.1} parent=1 // pred_check
      _
    $region23: #{tpu_custom_call.1} parent=1 // pred_check_branch
      %57 = sbr.rel (0) target = $region25
    $region24: #{tpu_custom_call.1} parent=1 // pred_region
      _
    $region25: #{tpu_custom_call.1} parent=1 // pred_fallthru
      _
    // Predicated region
    $region26: #{tpu_custom_call.1} parent=1 // pred_check
      _
    $region27: #{tpu_custom_call.1} parent=1 // pred_check_branch
      %59 = sbr.rel (0) target = $region29
    $region28: #{tpu_custom_call.1} parent=1 // pred_region
      %s61 = ssub.s32 256, 256
      %62 = vsyncadd [#allocation8], %s61
      %s63 = sshll.u32 [#allocation7], 4
      %s64 = int_to_ptr.vmem [resolvable:$true] %s63
      %69 = dma.hbm_to_vmem [thread:$0]  %s6, 256, %s64, [#allocation8], 64, 64, 4
    $region29: #{tpu_custom_call.1} parent=1 // pred_fallthru
      _
    // Predicated region
    $region30: #{tpu_custom_call.1} parent=1 // pred_check
      _
    $region31: #{tpu_custom_call.1} parent=1 // pred_check_branch
      %71 = sbr.rel (0) target = $region33
    $region32: #{tpu_custom_call.1} parent=1 // pred_region
      _
    $region33: #{tpu_custom_call.1} parent=1 // pred_fallthru
      _
    // Predicated region
    $region34: #{tpu_custom_call.1} parent=1 // pred_check
      _
    $region35: #{tpu_custom_call.1} parent=1 // pred_check_branch
      %73 = sbr.rel (0) target = $region37
    $region36: #{tpu_custom_call.1} parent=1 // pred_region
      _
    $region37: #{tpu_custom_call.1} parent=1 // pred_fallthru
      _
    // Predicated region
    $region38: #{tpu_custom_call.1} parent=1 // pred_check
      _
    $region39: #{tpu_custom_call.1} parent=1 // pred_check_branch
      %75 = sbr.rel (0) target = $region41
    $region40: #{tpu_custom_call.1} parent=1 // pred_region
      _
    $region41: #{tpu_custom_call.1} parent=1 // pred_fallthru
      _
    // Predicated region
    $region42: #{tpu_custom_call.1} parent=1 // pred_check
      _
    $region43: #{tpu_custom_call.1} parent=1 // pred_check_branch
      %77 = sbr.rel (0) target = $region45
    $region44: #{tpu_custom_call.1} parent=1 // pred_region
      %78 = dma.done [#allocation3], 128
    $region45: #{tpu_custom_call.1} parent=1 // pred_fallthru
      _
    // Predicated region
    $region46: #{tpu_custom_call.1} parent=1 // pred_check
      _
    $region47: #{tpu_custom_call.1} parent=1 // pred_check_branch
      %80 = sbr.rel (0) target = $region49
    $region48: #{tpu_custom_call.1} parent=1 // pred_region
      %81 = dma.done [#allocation5], 256
    $region49: #{tpu_custom_call.1} parent=1 // pred_fallthru
      _
    // Predicated region
    $region50: #{tpu_custom_call.1} parent=1 // pred_check
      _
    $region51: #{tpu_custom_call.1} parent=1 // pred_check_branch
      %83 = sbr.rel (0) target = $region53
    $region52: #{tpu_custom_call.1} parent=1 // pred_region
      %84 = dma.done [#allocation5], 256
    $region53: #{tpu_custom_call.1} parent=1 // pred_fallthru
      _
    // Predicated region
    $region54: #{tpu_custom_call.1} parent=1 // pred_check
      _
    $region55: #{tpu_custom_call.1} parent=1 // pred_check_branch
      %86 = sbr.rel (0) target = $region57
    $region56: #{tpu_custom_call.1} parent=1 // pred_region
      %87 = dma.done [#allocation8], 256
    $region57: #{tpu_custom_call.1} parent=1 // pred_fallthru
      _
    %v89 = vld [vmem:[#allocation2] sm:$0xff]
    %v90 = vpack.c.bf16 %v89, %v89
    %v91 = vld [vmem:[%s1] sm:$0xff]
    %v92 = vld [vmem:[%s1 + $0x8] sm:$0xff]
    %v95 = vunpack.c.l.b16 %v91
    %v96 = vunpack.c.h.b16 %v91
    %v97 = vunpack.c.l.b16 %v92
    %v98 = vunpack.c.h.b16 %v92
    %v99 = vpack.c.b16 %v97, %v95
    %v100 = vpack.c.b16 %v98, %v96
    %vm103 = vcmask 130048
    %v105 = vsel %vm103, %v90, 0
    %107 = vmatprep.subr.bf16.mxu0 %v100
    %108 = vmatpush1.bf16.msra.mxu0 %v99
    %109 = vmatprep.subr.bf16.mxu0 0
    %110 = vmatpush1.bf16.msra.mxu0 0
    %111 = vmatprep.subr.bf16.mxu0 0
    %112 = vmatpush1.bf16.msra.mxu0 0
    %113 = vmatprep.subr.bf16.mxu0 0
    %114 = vmatpush1.bf16.msra.mxu0 0
    %115 = vmatprep.subr.bf16.mxu0 0
    %116 = vmatpush1.bf16.msra.mxu0 0
    %117 = vmatprep.subr.bf16.mxu0 0
    %118 = vmatpush1.bf16.msra.mxu0 0
    %119 = vmatprep.subr.bf16.mxu0 0
    %120 = vmatpush1.bf16.msra.mxu0 0
    %121 = vmatprep.subr.bf16.mxu0 0
    %122 = vmatpush1.bf16.msra.mxu0 0
    %123 = vmatprep.subr.bf16.mxu0 0
    %124 = vmatpush1.bf16.msra.mxu0 0
    %125 = vmatprep.subr.bf16.mxu0 0
    %126 = vmatpush1.bf16.msra.mxu0 0
    %127 = vmatprep.subr.bf16.mxu0 0
    %128 = vmatpush1.bf16.msra.mxu0 0
    %129 = vmatprep.subr.bf16.mxu0 0
    %130 = vmatpush1.bf16.msra.mxu0 0
    %131 = vmatprep.subr.bf16.mxu0 0
    %132 = vmatpush1.bf16.msra.mxu0 0
    %133 = vmatprep.subr.bf16.mxu0 0
    %134 = vmatpush1.bf16.msra.mxu0 0
    %135 = vmatprep.subr.bf16.mxu0 0
    %136 = vmatpush1.bf16.msra.mxu0 0
    %137 = vmatprep.subr.bf16.mxu0 0
    %138 = vmatpush1.bf16.msra.mxu0 0
    %139 = vmatprep.mubr.bf16.mxu0 0
    %140 = vmatmul.mubr.bf16.gmra.mrb[0].mxu0 %v105
    %v141 = vpop.f32.mrb[0].mxu0
    %v142 = vadd.f32 0.0, %v141
    %v143 = vpop.f32.mrb[0].mxu0
    %v144 = vadd.f32 0.0, %v143
    %v145 = vpop.f32.mrb[0].mxu0
    %v146 = vpop.f32.mrb[0].mxu0
    %147 = vdwg.mxu0
    %v148 = vtanh.pop %v142
    %v149 = vtanh.pop %v144
    %v150 = vlaneseq
    %v151 = vand.u32 %v150, 127
    %vm152 = vcmp.ge.s32.totalorder %v151, 64
    %vm153 = vcmp.lt.s32.totalorder %v151, 96
    %vm154 = vmand %vm152, %vm153
    %v155 = vld [vmem:[#allocation4] sm:$0xf]
    %v156 = vld [vmem:[#allocation4 + $0x4] sm:$0xf]
    %v157 = vld [vmem:[#allocation4 + $0x8] sm:$0xf]
    %v158 = vld [vmem:[#allocation4 + $0xc] sm:$0xf]
    %v159 = vld [vmem:[#allocation6] sm:$0xf]
    %v160 = vld [vmem:[#allocation6 + $0x4] sm:$0xf]
    %v161 = vld [vmem:[#allocation6 + $0x8] sm:$0xf]
    %v162 = vld [vmem:[#allocation6 + $0xc] sm:$0xf]
    %v163 = vld [vmem:[%s4] sm:$0x1]
    %165 = vrot.lane.b32.xlu0 %v148, 96
    %v166 = vpop.permute.xlu0 %165
    %168 = vrot.lane.b32.xlu0 %v148, 64
    %v169 = vpop.permute.xlu0 %168
    %171 = vrot.lane.b32.xlu0 %v148, 32
    %v172 = vpop.permute.xlu0 %171
    %175 = vrot.lane.b32.xlu0 %v149, 96
    %v176 = vpop.permute.xlu0 %175
    %178 = vrot.lane.b32.xlu0 %v149, 64
    %v179 = vpop.permute.xlu0 %178
    %181 = vrot.lane.b32.xlu0 %v149, 32
    %v182 = vpop.permute.xlu0 %181
    %v184 = vpack.c.bf16 %v166, %v148
    %v185 = vpack.c.bf16 %v172, %v169
    %v186 = vpack.c.bf16 %v176, %v149
    %v187 = vpack.c.bf16 %v182, %v179
    %v189 = vlaneseq
    %v190 = vshrl.u32 %v189, 7
    %v191 = vsub.s32 0, %v190
    %v192 = vrot.slane %v163, %v191
    %v198 = vunpack.c.l.b16 %v155
    %v199 = vunpack.c.l.b16 %v156
    %v200 = vunpack.c.l.b16 %v157
    %v201 = vunpack.c.l.b16 %v158
    %v202 = vpack.c.b16 %v199, %v198
    %v203 = vpack.c.b16 %v201, %v200
    %vm206 = vcmask 261120
    %v208 = vsel %vm206, %v184, 0
    %v211 = vsel %vm206, %v185, 0
    %v214 = vsel %vm206, %v186, 0
    %v217 = vsel %vm206, %v187, 0
    %219 = vmatprep.subr.bf16.mxu0 0
    %220 = vmatpush1.bf16.msra.mxu0 %v202
    %221 = vmatprep.subr.bf16.mxu0 0
    %222 = vmatpush1.bf16.msra.mxu0 %v203
    %223 = vmatprep.subr.bf16.mxu0 0
    %224 = vmatpush1.bf16.msra.mxu0 0
    %225 = vmatprep.subr.bf16.mxu0 0
    %226 = vmatpush1.bf16.msra.mxu0 0
    %227 = vmatprep.subr.bf16.mxu0 0
    %228 = vmatpush1.bf16.msra.mxu0 0
    %229 = vmatprep.subr.bf16.mxu0 0
    %230 = vmatpush1.bf16.msra.mxu0 0
    %231 = vmatprep.subr.bf16.mxu0 0
    %232 = vmatpush1.bf16.msra.mxu0 0
    %233 = vmatprep.subr.bf16.mxu0 0
    %234 = vmatpush1.bf16.msra.mxu0 0
    %235 = vmatprep.subr.bf16.mxu0 0
    %236 = vmatpush1.bf16.msra.mxu0 0
    %237 = vmatprep.subr.bf16.mxu0 0
    %238 = vmatpush1.bf16.msra.mxu0 0
    %239 = vmatprep.subr.bf16.mxu0 0
    %240 = vmatpush1.bf16.msra.mxu0 0
    %241 = vmatprep.subr.bf16.mxu0 0
    %242 = vmatpush1.bf16.msra.mxu0 0
    %243 = vmatprep.subr.bf16.mxu0 0
    %244 = vmatpush1.bf16.msra.mxu0 0
    %245 = vmatprep.subr.bf16.mxu0 0
    %246 = vmatpush1.bf16.msra.mxu0 0
    %247 = vmatprep.subr.bf16.mxu0 0
    %248 = vmatpush1.bf16.msra.mxu0 0
    %249 = vmatprep.subr.bf16.mxu0 0
    %250 = vmatpush1.bf16.msra.mxu0 0
    %251 = vmatprep.mubr.bf16.mxu0 0
    %252 = vmatmul.mubr.bf16.gmra.mrb[0].mxu0 %v208
    %v253 = vpop.f32.mrb[0].mxu0
    %v254 = vadd.f32 %v192, %v253
    %v255 = vpop.f32.mrb[0].mxu0
    %v256 = vpop.f32.mrb[0].mxu0
    %v257 = vadd.f32 %v192, %v256
    %v258 = vpop.f32.mrb[0].mxu0
    %259 = vmatprep.mubr.bf16.mxu0 0
    %260 = vmatmul.mubr.bf16.gmra.mrb[0].mxu0 %v211
    %v261 = vpop.f32.mrb[0].mxu0
    %v262 = vadd.f32 %v192, %v261
    %v263 = vpop.f32.mrb[0].mxu0
    %v264 = vpop.f32.mrb[0].mxu0
    %v265 = vadd.f32 %v192, %v264
    %v266 = vpop.f32.mrb[0].mxu0
    %267 = vmatprep.mubr.bf16.mxu0 0
    %268 = vmatmul.mubr.bf16.gmra.mrb[0].mxu0 %v214
    %v269 = vpop.f32.mrb[0].mxu0
    %v270 = vadd.f32 %v192, %v269
    %v271 = vpop.f32.mrb[0].mxu0
    %v272 = vpop.f32.mrb[0].mxu0
    %v273 = vadd.f32 %v192, %v272
    %v274 = vpop.f32.mrb[0].mxu0
    %275 = vmatprep.mubr.bf16.mxu0 0
    %276 = vmatmul.mubr.bf16.gmra.mrb[0].mxu0 %v217
    %v277 = vpop.f32.mrb[0].mxu0
    %v278 = vadd.f32 %v192, %v277
    %v279 = vpop.f32.mrb[0].mxu0
    %v280 = vpop.f32.mrb[0].mxu0
    %v281 = vadd.f32 %v192, %v280
    %v282 = vpop.f32.mrb[0].mxu0
    %283 = vdwg.mxu0
    %v288 = vunpack.c.l.b16 %v159
    %v289 = vunpack.c.l.b16 %v160
    %v290 = vunpack.c.l.b16 %v161
    %v291 = vunpack.c.l.b16 %v162
    %v292 = vpack.c.b16 %v289, %v288
    %v293 = vpack.c.b16 %v291, %v290
    %v297 = vsel %vm206, 0, 0
    %299 = vmatprep.subr.bf16.mxu0 0
    %300 = vmatpush1.bf16.msra.mxu0 %v292
    %301 = vmatprep.subr.bf16.mxu0 0
    %302 = vmatpush1.bf16.msra.mxu0 %v293
    %303 = vmatprep.subr.bf16.mxu0 0
    %304 = vmatpush1.bf16.msra.mxu0 0
    %305 = vmatprep.subr.bf16.mxu0 0
    %306 = vmatpush1.bf16.msra.mxu0 0
    %307 = vmatprep.subr.bf16.mxu0 0
    %308 = vmatpush1.bf16.msra.mxu0 0
    %309 = vmatprep.subr.bf16.mxu0 0
    %310 = vmatpush1.bf16.msra.mxu0 0
    %311 = vmatprep.subr.bf16.mxu0 0
    %312 = vmatpush1.bf16.msra.mxu0 0
    %313 = vmatprep.subr.bf16.mxu0 0
    %314 = vmatpush1.bf16.msra.mxu0 0
    %315 = vmatprep.subr.bf16.mxu0 0
    %316 = vmatpush1.bf16.msra.mxu0 0
    %317 = vmatprep.subr.bf16.mxu0 0
    %318 = vmatpush1.bf16.msra.mxu0 0
    %319 = vmatprep.subr.bf16.mxu0 0
    %320 = vmatpush1.bf16.msra.mxu0 0
    %321 = vmatprep.subr.bf16.mxu0 0
    %322 = vmatpush1.bf16.msra.mxu0 0
    %323 = vmatprep.subr.bf16.mxu0 0
    %324 = vmatpush1.bf16.msra.mxu0 0
    %325 = vmatprep.subr.bf16.mxu0 0
    %326 = vmatpush1.bf16.msra.mxu0 0
    %327 = vmatprep.subr.bf16.mxu0 0
    %328 = vmatpush1.bf16.msra.mxu0 0
    %329 = vmatprep.subr.bf16.mxu0 0
    %330 = vmatpush1.bf16.msra.mxu0 0
    %331 = vmatprep.mubr.bf16.mxu0 0
    %332 = vmatmul.mubr.bf16.gmra.mrb[0].mxu0 %v297
    %v333 = vpop.f32.mrb[0].mxu0
    %v334 = vadd.f32 0.0, %v333
    %v335 = vpop.f32.mrb[0].mxu0
    %v336 = vpop.f32.mrb[0].mxu0
    %v337 = vpop.f32.mrb[0].mxu0
    %338 = vdwg.mxu0
    %v339 = vadd.f32 %v254, %v334
    %v340 = vxor.u32 %v339, 2147483648
    %v341 = vmul.f32 %v340, 1.442695
    %v342 = vpow.pop %v341
    %v343 = vadd.f32 %v342, 1.0
    %v344 = vrcp.pop %v343
    %v345 = vmul.f32 1.0, %v344
    %v346 = vmul.f32 %v345, 2.0
    %v347 = vsub.f32 %v346, 1.0
    %v348 = vsel %vm154, %v347, %v345
    %v349 = vmul.f32 %v348, 0.0
    %351 = vrot.lane.b32.xlu0 %v348, 64
    %v352 = vpop.permute.xlu0 %351
    %v354 = vmul.f32 %v348, %v352
    %356 = vrot.lane.b32.xlu0 %v354, 32
    %v357 = vpop.permute.xlu0 %356
    %v359 = vadd.f32 %v349, %v357
    %v360 = vtanh.pop %v359
    %362 = vrot.lane.b32.xlu0 %v360, 64
    %v363 = vpop.permute.xlu0 %362
    %v365 = vmul.f32 %v348, %v363
    %v366 = vpack.c.bf16 %v365, %v365
    %368 = vrot.lane.b32.xlu0 %v366, 32
    %v369 = vpop.permute.xlu0 %368
    %v371 = vsel %vm206, %v369, 0
    %373 = vmatprep.subr.bf16.mxu0 0
    %374 = vmatpush1.bf16.msra.mxu0 %v292
    %375 = vmatprep.subr.bf16.mxu0 0
    %376 = vmatpush1.bf16.msra.mxu0 %v293
    %377 = vmatprep.subr.bf16.mxu0 0
    %378 = vmatpush1.bf16.msra.mxu0 0
    %379 = vmatprep.subr.bf16.mxu0 0
    %380 = vmatpush1.bf16.msra.mxu0 0
    %381 = vmatprep.subr.bf16.mxu0 0
    %382 = vmatpush1.bf16.msra.mxu0 0
    %383 = vmatprep.subr.bf16.mxu0 0
    %384 = vmatpush1.bf16.msra.mxu0 0
    %385 = vmatprep.subr.bf16.mxu0 0
    %386 = vmatpush1.bf16.msra.mxu0 0
    %387 = vmatprep.subr.bf16.mxu0 0
    %388 = vmatpush1.bf16.msra.mxu0 0
    %389 = vmatprep.subr.bf16.mxu0 0
    %390 = vmatpush1.bf16.msra.mxu0 0
    %391 = vmatprep.subr.bf16.mxu0 0
    %392 = vmatpush1.bf16.msra.mxu0 0
    %393 = vmatprep.subr.bf16.mxu0 0
    %394 = vmatpush1.bf16.msra.mxu0 0
    %395 = vmatprep.subr.bf16.mxu0 0
    %396 = vmatpush1.bf16.msra.mxu0 0
    %397 = vmatprep.subr.bf16.mxu0 0
    %398 = vmatpush1.bf16.msra.mxu0 0
    %399 = vmatprep.subr.bf16.mxu0 0
    %400 = vmatpush1.bf16.msra.mxu0 0
    %401 = vmatprep.subr.bf16.mxu0 0
    %402 = vmatpush1.bf16.msra.mxu0 0
    %403 = vmatprep.subr.bf16.mxu0 0
    %404 = vmatpush1.bf16.msra.mxu0 0
    %405 = vmatprep.mubr.bf16.mxu0 0
    %406 = vmatmul.mubr.bf16.gmra.mrb[0].mxu0 %v371
    %v407 = vpop.f32.mrb[0].mxu0
    %v408 = vadd.f32 0.0, %v407
    %v409 = vpop.f32.mrb[0].mxu0
    %v410 = vpop.f32.mrb[0].mxu0
    %v411 = vpop.f32.mrb[0].mxu0
    %412 = vdwg.mxu0
    %v413 = vadd.f32 %v257, %v408
    %v414 = vxor.u32 %v413, 2147483648
    %v415 = vmul.f32 %v414, 1.442695
    %v416 = vpow.pop %v415
    %v417 = vadd.f32 %v416, 1.0
    %v418 = vrcp.pop %v417
    %v419 = vmul.f32 1.0, %v418
    %v420 = vmul.f32 %v419, 2.0
    %v421 = vsub.f32 %v420, 1.0
    %v422 = vsel %vm154, %v421, %v419
    %v423 = vmul.f32 %v422, %v359
    %425 = vrot.lane.b32.xlu0 %v422, 64
    %v426 = vpop.permute.xlu0 %425
    %v428 = vmul.f32 %v422, %v426
    %430 = vrot.lane.b32.xlu0 %v428, 32
    %v431 = vpop.permute.xlu0 %430
    %v433 = vadd.f32 %v423, %v431
    %v434 = vtanh.pop %v433
    %436 = vrot.lane.b32.xlu0 %v434, 64
    %v437 = vpop.permute.xlu0 %436
    %v439 = vmul.f32 %v422, %v437
    %v440 = vpack.c.bf16 %v439, %v439
    %442 = vrot.lane.b32.xlu0 %v440, 32
    %v443 = vpop.permute.xlu0 %442
    %v445 = vsel %vm206, %v443, 0
    %447 = vmatprep.subr.bf16.mxu0 0
    %448 = vmatpush1.bf16.msra.mxu0 %v292
    %449 = vmatprep.subr.bf16.mxu0 0
    %450 = vmatpush1.bf16.msra.mxu0 %v293
    %451 = vmatprep.subr.bf16.mxu0 0
    %452 = vmatpush1.bf16.msra.mxu0 0
    %453 = vmatprep.subr.bf16.mxu0 0
    %454 = vmatpush1.bf16.msra.mxu0 0
    %455 = vmatprep.subr.bf16.mxu0 0
    %456 = vmatpush1.bf16.msra.mxu0 0
    %457 = vmatprep.subr.bf16.mxu0 0
    %458 = vmatpush1.bf16.msra.mxu0 0
    %459 = vmatprep.subr.bf16.mxu0 0
    %460 = vmatpush1.bf16.msra.mxu0 0
    %461 = vmatprep.subr.bf16.mxu0 0
    %462 = vmatpush1.bf16.msra.mxu0 0
    %463 = vmatprep.subr.bf16.mxu0 0
    %464 = vmatpush1.bf16.msra.mxu0 0
    %465 = vmatprep.subr.bf16.mxu0 0
    %466 = vmatpush1.bf16.msra.mxu0 0
    %467 = vmatprep.subr.bf16.mxu0 0
    %468 = vmatpush1.bf16.msra.mxu0 0
    %469 = vmatprep.subr.bf16.mxu0 0
    %470 = vmatpush1.bf16.msra.mxu0 0
    %471 = vmatprep.subr.bf16.mxu0 0
    %472 = vmatpush1.bf16.msra.mxu0 0
    %473 = vmatprep.subr.bf16.mxu0 0
    %474 = vmatpush1.bf16.msra.mxu0 0
    %475 = vmatprep.subr.bf16.mxu0 0
    %476 = vmatpush1.bf16.msra.mxu0 0
    %477 = vmatprep.subr.bf16.mxu0 0
    %478 = vmatpush1.bf16.msra.mxu0 0
    %479 = vmatprep.mubr.bf16.mxu0 0
    %480 = vmatmul.mubr.bf16.gmra.mrb[0].mxu0 %v445
    %v481 = vpop.f32.mrb[0].mxu0
    %v482 = vadd.f32 0.0, %v481
    %v483 = vpop.f32.mrb[0].mxu0
    %v484 = vpop.f32.mrb[0].mxu0
    %v485 = vpop.f32.mrb[0].mxu0
    %486 = vdwg.mxu0
    %v487 = vadd.f32 %v262, %v482
    %v488 = vxor.u32 %v487, 2147483648
    %v489 = vmul.f32 %v488, 1.442695
    %v490 = vpow.pop %v489
    %v491 = vadd.f32 %v490, 1.0
    %v492 = vrcp.pop %v491
    %v493 = vmul.f32 1.0, %v492
    %v494 = vmul.f32 %v493, 2.0
    %v495 = vsub.f32 %v494, 1.0
    %v496 = vsel %vm154, %v495, %v493
    %v497 = vmul.f32 %v496, %v433
    %499 = vrot.lane.b32.xlu0 %v496, 64
    %v500 = vpop.permute.xlu0 %499
    %v502 = vmul.f32 %v496, %v500
    %504 = vrot.lane.b32.xlu0 %v502, 32
    %v505 = vpop.permute.xlu0 %504
    %v507 = vadd.f32 %v497, %v505
    %v508 = vtanh.pop %v507
    %510 = vrot.lane.b32.xlu0 %v508, 64
    %v511 = vpop.permute.xlu0 %510
    %v513 = vmul.f32 %v496, %v511
    %v514 = vpack.c.bf16 %v513, %v513
    %516 = vrot.lane.b32.xlu0 %v514, 32
    %v517 = vpop.permute.xlu0 %516
    %v519 = vsel %vm206, %v517, 0
    %521 = vmatprep.subr.bf16.mxu0 0
    %522 = vmatpush1.bf16.msra.mxu0 %v292
    %523 = vmatprep.subr.bf16.mxu0 0
    %524 = vmatpush1.bf16.msra.mxu0 %v293
    %525 = vmatprep.subr.bf16.mxu0 0
    %526 = vmatpush1.bf16.msra.mxu0 0
    %527 = vmatprep.subr.bf16.mxu0 0
    %528 = vmatpush1.bf16.msra.mxu0 0
    %529 = vmatprep.subr.bf16.mxu0 0
    %530 = vmatpush1.bf16.msra.mxu0 0
    %531 = vmatprep.subr.bf16.mxu0 0
    %532 = vmatpush1.bf16.msra.mxu0 0
    %533 = vmatprep.subr.bf16.mxu0 0
    %534 = vmatpush1.bf16.msra.mxu0 0
    %535 = vmatprep.subr.bf16.mxu0 0
    %536 = vmatpush1.bf16.msra.mxu0 0
    %537 = vmatprep.subr.bf16.mxu0 0
    %538 = vmatpush1.bf16.msra.mxu0 0
    %539 = vmatprep.subr.bf16.mxu0 0
    %540 = vmatpush1.bf16.msra.mxu0 0
    %541 = vmatprep.subr.bf16.mxu0 0
    %542 = vmatpush1.bf16.msra.mxu0 0
    %543 = vmatprep.subr.bf16.mxu0 0
    %544 = vmatpush1.bf16.msra.mxu0 0
    %545 = vmatprep.subr.bf16.mxu0 0
    %546 = vmatpush1.bf16.msra.mxu0 0
    %547 = vmatprep.subr.bf16.mxu0 0
    %548 = vmatpush1.bf16.msra.mxu0 0
    %549 = vmatprep.subr.bf16.mxu0 0
    %550 = vmatpush1.bf16.msra.mxu0 0
    %551 = vmatprep.subr.bf16.mxu0 0
    %552 = vmatpush1.bf16.msra.mxu0 0
    %553 = vmatprep.mubr.bf16.mxu0 0
    %554 = vmatmul.mubr.bf16.gmra.mrb[0].mxu0 %v519
    %v555 = vpop.f32.mrb[0].mxu0
    %v556 = vadd.f32 0.0, %v555
    %v557 = vpop.f32.mrb[0].mxu0
    %v558 = vpop.f32.mrb[0].mxu0
    %v559 = vpop.f32.mrb[0].mxu0
    %560 = vdwg.mxu0
    %v561 = vadd.f32 %v265, %v556
    %v562 = vxor.u32 %v561, 2147483648
    %v563 = vmul.f32 %v562, 1.442695
    %v564 = vpow.pop %v563
    %v565 = vadd.f32 %v564, 1.0
    %v566 = vrcp.pop %v565
    %v567 = vmul.f32 1.0, %v566
    %v568 = vmul.f32 %v567, 2.0
    %v569 = vsub.f32 %v568, 1.0
    %v570 = vsel %vm154, %v569, %v567
    %v571 = vmul.f32 %v570, %v507
    %573 = vrot.lane.b32.xlu0 %v570, 64
    %v574 = vpop.permute.xlu0 %573
    %v576 = vmul.f32 %v570, %v574
    %578 = vrot.lane.b32.xlu0 %v576, 32
    %v579 = vpop.permute.xlu0 %578
    %v581 = vadd.f32 %v571, %v579
    %v582 = vtanh.pop %v581
    %584 = vrot.lane.b32.xlu0 %v582, 64
    %v585 = vpop.permute.xlu0 %584
    %v587 = vmul.f32 %v570, %v585
    %v588 = vpack.c.bf16 %v587, %v587
    %590 = vrot.lane.b32.xlu0 %v588, 32
    %v591 = vpop.permute.xlu0 %590
    %v593 = vsel %vm206, %v591, 0
    %595 = vmatprep.subr.bf16.mxu0 0
    %596 = vmatpush1.bf16.msra.mxu0 %v292
    %597 = vmatprep.subr.bf16.mxu0 0
    %598 = vmatpush1.bf16.msra.mxu0 %v293
    %599 = vmatprep.subr.bf16.mxu0 0
    %600 = vmatpush1.bf16.msra.mxu0 0
    %601 = vmatprep.subr.bf16.mxu0 0
    %602 = vmatpush1.bf16.msra.mxu0 0
    %603 = vmatprep.subr.bf16.mxu0 0
    %604 = vmatpush1.bf16.msra.mxu0 0
    %605 = vmatprep.subr.bf16.mxu0 0
    %606 = vmatpush1.bf16.msra.mxu0 0
    %607 = vmatprep.subr.bf16.mxu0 0
    %608 = vmatpush1.bf16.msra.mxu0 0
    %609 = vmatprep.subr.bf16.mxu0 0
    %610 = vmatpush1.bf16.msra.mxu0 0
    %611 = vmatprep.subr.bf16.mxu0 0
    %612 = vmatpush1.bf16.msra.mxu0 0
    %613 = vmatprep.subr.bf16.mxu0 0
    %614 = vmatpush1.bf16.msra.mxu0 0
    %615 = vmatprep.subr.bf16.mxu0 0
    %616 = vmatpush1.bf16.msra.mxu0 0
    %617 = vmatprep.subr.bf16.mxu0 0
    %618 = vmatpush1.bf16.msra.mxu0 0
    %619 = vmatprep.subr.bf16.mxu0 0
    %620 = vmatpush1.bf16.msra.mxu0 0
    %621 = vmatprep.subr.bf16.mxu0 0
    %622 = vmatpush1.bf16.msra.mxu0 0
    %623 = vmatprep.subr.bf16.mxu0 0
    %624 = vmatpush1.bf16.msra.mxu0 0
    %625 = vmatprep.subr.bf16.mxu0 0
    %626 = vmatpush1.bf16.msra.mxu0 0
    %627 = vmatprep.mubr.bf16.mxu0 0
    %628 = vmatmul.mubr.bf16.gmra.mrb[0].mxu0 %v593
    %v629 = vpop.f32.mrb[0].mxu0
    %v630 = vadd.f32 0.0, %v629
    %v631 = vpop.f32.mrb[0].mxu0
    %v632 = vpop.f32.mrb[0].mxu0
    %v633 = vpop.f32.mrb[0].mxu0
    %634 = vdwg.mxu0
    %v635 = vadd.f32 %v270, %v630
    %v636 = vxor.u32 %v635, 2147483648
    %v637 = vmul.f32 %v636, 1.442695
    %v638 = vpow.pop %v637
    %v639 = vadd.f32 %v638, 1.0
    %v640 = vrcp.pop %v639
    %v641 = vmul.f32 1.0, %v640
    %v642 = vmul.f32 %v641, 2.0
    %v643 = vsub.f32 %v642, 1.0
    %v644 = vsel %vm154, %v643, %v641
    %v645 = vmul.f32 %v644, %v581
    %647 = vrot.lane.b32.xlu0 %v644, 64
    %v648 = vpop.permute.xlu0 %647
    %v650 = vmul.f32 %v644, %v648
    %652 = vrot.lane.b32.xlu0 %v650, 32
    %v653 = vpop.permute.xlu0 %652
    %v655 = vadd.f32 %v645, %v653
    %v656 = vtanh.pop %v655
    %658 = vrot.lane.b32.xlu0 %v656, 64
    %v659 = vpop.permute.xlu0 %658
    %v661 = vmul.f32 %v644, %v659
    %v662 = vpack.c.bf16 %v661, %v661
    %664 = vrot.lane.b32.xlu0 %v662, 32
    %v665 = vpop.permute.xlu0 %664
    %v667 = vsel %vm206, %v665, 0
    %669 = vmatprep.subr.bf16.mxu0 0
    %670 = vmatpush1.bf16.msra.mxu0 %v292
    %671 = vmatprep.subr.bf16.mxu0 0
    %672 = vmatpush1.bf16.msra.mxu0 %v293
    %673 = vmatprep.subr.bf16.mxu0 0
    %674 = vmatpush1.bf16.msra.mxu0 0
    %675 = vmatprep.subr.bf16.mxu0 0
    %676 = vmatpush1.bf16.msra.mxu0 0
    %677 = vmatprep.subr.bf16.mxu0 0
    %678 = vmatpush1.bf16.msra.mxu0 0
    %679 = vmatprep.subr.bf16.mxu0 0
    %680 = vmatpush1.bf16.msra.mxu0 0
    %681 = vmatprep.subr.bf16.mxu0 0
    %682 = vmatpush1.bf16.msra.mxu0 0
    %683 = vmatprep.subr.bf16.mxu0 0
    %684 = vmatpush1.bf16.msra.mxu0 0
    %685 = vmatprep.subr.bf16.mxu0 0
    %686 = vmatpush1.bf16.msra.mxu0 0
    %687 = vmatprep.subr.bf16.mxu0 0
    %688 = vmatpush1.bf16.msra.mxu0 0
    %689 = vmatprep.subr.bf16.mxu0 0
    %690 = vmatpush1.bf16.msra.mxu0 0
    %691 = vmatprep.subr.bf16.mxu0 0
    %692 = vmatpush1.bf16.msra.mxu0 0
    %693 = vmatprep.subr.bf16.mxu0 0
    %694 = vmatpush1.bf16.msra.mxu0 0
    %695 = vmatprep.subr.bf16.mxu0 0
    %696 = vmatpush1.bf16.msra.mxu0 0
    %697 = vmatprep.subr.bf16.mxu0 0
    %698 = vmatpush1.bf16.msra.mxu0 0
    %699 = vmatprep.subr.bf16.mxu0 0
    %700 = vmatpush1.bf16.msra.mxu0 0
    %701 = vmatprep.mubr.bf16.mxu0 0
    %702 = vmatmul.mubr.bf16.gmra.mrb[0].mxu0 %v667
    %v703 = vpop.f32.mrb[0].mxu0
    %v704 = vadd.f32 0.0, %v703
    %v705 = vpop.f32.mrb[0].mxu0
    %v706 = vpop.f32.mrb[0].mxu0
    %v707 = vpop.f32.mrb[0].mxu0
    %708 = vdwg.mxu0
    %v709 = vadd.f32 %v273, %v704
    %v710 = vxor.u32 %v709, 2147483648
    %v711 = vmul.f32 %v710, 1.442695
    %v712 = vpow.pop %v711
    %v713 = vadd.f32 %v712, 1.0
    %v714 = vrcp.pop %v713
    %v715 = vmul.f32 1.0, %v714
    %v716 = vmul.f32 %v715, 2.0
    %v717 = vsub.f32 %v716, 1.0
    %v718 = vsel %vm154, %v717, %v715
    %v719 = vmul.f32 %v718, %v655
    %721 = vrot.lane.b32.xlu0 %v718, 64
    %v722 = vpop.permute.xlu0 %721
    %v724 = vmul.f32 %v718, %v722
    %726 = vrot.lane.b32.xlu0 %v724, 32
    %v727 = vpop.permute.xlu0 %726
    %v729 = vadd.f32 %v719, %v727
    %v730 = vtanh.pop %v729
    %732 = vrot.lane.b32.xlu0 %v730, 64
    %v733 = vpop.permute.xlu0 %732
    %v735 = vmul.f32 %v718, %v733
    %v736 = vpack.c.bf16 %v735, %v735
    %738 = vrot.lane.b32.xlu0 %v736, 32
    %v739 = vpop.permute.xlu0 %738
    %v741 = vsel %vm206, %v739, 0
    %743 = vmatprep.subr.bf16.mxu0 0
    %744 = vmatpush1.bf16.msra.mxu0 %v292
    %745 = vmatprep.subr.bf16.mxu0 0
    %746 = vmatpush1.bf16.msra.mxu0 %v293
    %747 = vmatprep.subr.bf16.mxu0 0
    %748 = vmatpush1.bf16.msra.mxu0 0
    %749 = vmatprep.subr.bf16.mxu0 0
    %750 = vmatpush1.bf16.msra.mxu0 0
    %751 = vmatprep.subr.bf16.mxu0 0
    %752 = vmatpush1.bf16.msra.mxu0 0
    %753 = vmatprep.subr.bf16.mxu0 0
    %754 = vmatpush1.bf16.msra.mxu0 0
    %755 = vmatprep.subr.bf16.mxu0 0
    %756 = vmatpush1.bf16.msra.mxu0 0
    %757 = vmatprep.subr.bf16.mxu0 0
    %758 = vmatpush1.bf16.msra.mxu0 0
    %759 = vmatprep.subr.bf16.mxu0 0
    %760 = vmatpush1.bf16.msra.mxu0 0
    %761 = vmatprep.subr.bf16.mxu0 0
    %762 = vmatpush1.bf16.msra.mxu0 0
    %763 = vmatprep.subr.bf16.mxu0 0
    %764 = vmatpush1.bf16.msra.mxu0 0
    %765 = vmatprep.subr.bf16.mxu0 0
    %766 = vmatpush1.bf16.msra.mxu0 0
    %767 = vmatprep.subr.bf16.mxu0 0
    %768 = vmatpush1.bf16.msra.mxu0 0
    %769 = vmatprep.subr.bf16.mxu0 0
    %770 = vmatpush1.bf16.msra.mxu0 0
    %771 = vmatprep.subr.bf16.mxu0 0
    %772 = vmatpush1.bf16.msra.mxu0 0
    %773 = vmatprep.subr.bf16.mxu0 0
    %774 = vmatpush1.bf16.msra.mxu0 0
    %775 = vmatprep.mubr.bf16.mxu0 0
    %776 = vmatmul.mubr.bf16.gmra.mrb[0].mxu0 %v741
    %v777 = vpop.f32.mrb[0].mxu0
    %v778 = vadd.f32 0.0, %v777
    %v779 = vpop.f32.mrb[0].mxu0
    %v780 = vpop.f32.mrb[0].mxu0
    %v781 = vpop.f32.mrb[0].mxu0
    %782 = vdwg.mxu0
    %v783 = vadd.f32 %v278, %v778
    %v784 = vxor.u32 %v783, 2147483648
    %v785 = vmul.f32 %v784, 1.442695
    %v786 = vpow.pop %v785
    %v787 = vadd.f32 %v786, 1.0
    %v788 = vrcp.pop %v787
    %v789 = vmul.f32 1.0, %v788
    %v790 = vmul.f32 %v789, 2.0
    %v791 = vsub.f32 %v790, 1.0
    %v792 = vsel %vm154, %v791, %v789
    %v793 = vmul.f32 %v792, %v729
    %795 = vrot.lane.b32.xlu0 %v792, 64
    %v796 = vpop.permute.xlu0 %795
    %v798 = vmul.f32 %v792, %v796
    %800 = vrot.lane.b32.xlu0 %v798, 32
    %v801 = vpop.permute.xlu0 %800
    %v803 = vadd.f32 %v793, %v801
    %v804 = vtanh.pop %v803
    %806 = vrot.lane.b32.xlu0 %v804, 64
    %v807 = vpop.permute.xlu0 %806
    %v809 = vmul.f32 %v792, %v807
    %v810 = vpack.c.bf16 %v809, %v809
    %812 = vrot.lane.b32.xlu0 %v810, 32
    %v813 = vpop.permute.xlu0 %812
    %v815 = vsel %vm206, %v813, 0
    %817 = vmatprep.subr.bf16.mxu0 0
    %818 = vmatpush1.bf16.msra.mxu0 %v292
    %819 = vmatprep.subr.bf16.mxu0 0
    %820 = vmatpush1.bf16.msra.mxu0 %v293
    %821 = vmatprep.subr.bf16.mxu0 0
    %822 = vmatpush1.bf16.msra.mxu0 0
    %823 = vmatprep.subr.bf16.mxu0 0
    %824 = vmatpush1.bf16.msra.mxu0 0
    %825 = vmatprep.subr.bf16.mxu0 0
    %826 = vmatpush1.bf16.msra.mxu0 0
    %827 = vmatprep.subr.bf16.mxu0 0
    %828 = vmatpush1.bf16.msra.mxu0 0
    %829 = vmatprep.subr.bf16.mxu0 0
    %830 = vmatpush1.bf16.msra.mxu0 0
    %831 = vmatprep.subr.bf16.mxu0 0
    %832 = vmatpush1.bf16.msra.mxu0 0
    %833 = vmatprep.subr.bf16.mxu0 0
    %834 = vmatpush1.bf16.msra.mxu0 0
    %835 = vmatprep.subr.bf16.mxu0 0
    %836 = vmatpush1.bf16.msra.mxu0 0
    %837 = vmatprep.subr.bf16.mxu0 0
    %838 = vmatpush1.bf16.msra.mxu0 0
    %839 = vmatprep.subr.bf16.mxu0 0
    %840 = vmatpush1.bf16.msra.mxu0 0
    %841 = vmatprep.subr.bf16.mxu0 0
    %842 = vmatpush1.bf16.msra.mxu0 0
    %843 = vmatprep.subr.bf16.mxu0 0
    %844 = vmatpush1.bf16.msra.mxu0 0
    %845 = vmatprep.subr.bf16.mxu0 0
    %846 = vmatpush1.bf16.msra.mxu0 0
    %847 = vmatprep.subr.bf16.mxu0 0
    %848 = vmatpush1.bf16.msra.mxu0 0
    %849 = vmatprep.mubr.bf16.mxu0 0
    %850 = vmatmul.mubr.bf16.gmra.mrb[0].mxu0 %v815
    %v851 = vpop.f32.mrb[0].mxu0
    %v852 = vadd.f32 0.0, %v851
    %v853 = vpop.f32.mrb[0].mxu0
    %v854 = vpop.f32.mrb[0].mxu0
    %v855 = vpop.f32.mrb[0].mxu0
    %856 = vdwg.mxu0
    %v857 = vadd.f32 %v281, %v852
    %v858 = vxor.u32 %v857, 2147483648
    %v859 = vmul.f32 %v858, 1.442695
    %v860 = vpow.pop %v859
    %v861 = vadd.f32 %v860, 1.0
    %v862 = vrcp.pop %v861
    %v863 = vmul.f32 1.0, %v862
    %v864 = vmul.f32 %v863, 2.0
    %v865 = vsub.f32 %v864, 1.0
    %v866 = vsel %vm154, %v865, %v863
    %v867 = vmul.f32 %v866, %v803
    %869 = vrot.lane.b32.xlu0 %v866, 64
    %v870 = vpop.permute.xlu0 %869
    %v872 = vmul.f32 %v866, %v870
    %874 = vrot.lane.b32.xlu0 %v872, 32
    %v875 = vpop.permute.xlu0 %874
    %v877 = vadd.f32 %v867, %v875
    %v878 = vtanh.pop %v877
    %880 = vrot.lane.b32.xlu0 %v878, 64
    %v881 = vpop.permute.xlu0 %880
    %v883 = vmul.f32 %v866, %v881
    %v884 = vld [vmem:[%s5] sm:$0xf]
    %v885 = vld [vmem:[%s5 + $0x4] sm:$0xf]
    %v886 = vld [vmem:[%s5 + $0x8] sm:$0xf]
    %v887 = vld [vmem:[%s5 + $0xc] sm:$0xf]
    %v888 = vld [vmem:[#allocation7] sm:$0xf]
    %v889 = vld [vmem:[#allocation7 + $0x4] sm:$0xf]
    %v890 = vld [vmem:[#allocation7 + $0x8] sm:$0xf]
    %v891 = vld [vmem:[#allocation7 + $0xc] sm:$0xf]
    %v892 = vld [vmem:[%s7] sm:$0x1]
    %v893 = vpack.c.bf16 %v439, %v365
    %v894 = vpack.c.bf16 %v587, %v513
    %v895 = vpack.c.bf16 %v735, %v661
    %v896 = vpack.c.bf16 %v883, %v809
    %v898 = vlaneseq
    %v899 = vshrl.u32 %v898, 7
    %v900 = vsub.s32 0, %v899
    %v901 = vrot.slane %v892, %v900
    %907 = vrot.lane.b32.xlu0 %v893, 32
    %v908 = vpop.permute.xlu0 %907
    %909 = vrot.lane.b32.xlu0 %v894, 32
    %v910 = vpop.permute.xlu0 %909
    %911 = vrot.lane.b32.xlu0 %v895, 32
    %v912 = vpop.permute.xlu0 %911
    %913 = vrot.lane.b32.xlu0 %v896, 32
    %v914 = vpop.permute.xlu0 %913
    %v919 = vunpack.c.l.b16 %v884
    %v920 = vunpack.c.l.b16 %v885
    %v921 = vunpack.c.l.b16 %v886
    %v922 = vunpack.c.l.b16 %v887
    %v923 = vpack.c.b16 %v920, %v919
    %v924 = vpack.c.b16 %v922, %v921
    %v928 = vsel %vm206, %v908, 0
    %v931 = vsel %vm206, %v910, 0
    %v934 = vsel %vm206, %v912, 0
    %v937 = vsel %vm206, %v914, 0
    %939 = vmatprep.subr.bf16.mxu0 0
    %940 = vmatpush1.bf16.msra.mxu0 %v923
    %941 = vmatprep.subr.bf16.mxu0 0
    %942 = vmatpush1.bf16.msra.mxu0 %v924
    %943 = vmatprep.subr.bf16.mxu0 0
    %944 = vmatpush1.bf16.msra.mxu0 0
    %945 = vmatprep.subr.bf16.mxu0 0
    %946 = vmatpush1.bf16.msra.mxu0 0
    %947 = vmatprep.subr.bf16.mxu0 0
    %948 = vmatpush1.bf16.msra.mxu0 0
    %949 = vmatprep.subr.bf16.mxu0 0
    %950 = vmatpush1.bf16.msra.mxu0 0
    %951 = vmatprep.subr.bf16.mxu0 0
    %952 = vmatpush1.bf16.msra.mxu0 0
    %953 = vmatprep.subr.bf16.mxu0 0
    %954 = vmatpush1.bf16.msra.mxu0 0
    %955 = vmatprep.subr.bf16.mxu0 0
    %956 = vmatpush1.bf16.msra.mxu0 0
    %957 = vmatprep.subr.bf16.mxu0 0
    %958 = vmatpush1.bf16.msra.mxu0 0
    %959 = vmatprep.subr.bf16.mxu0 0
    %960 = vmatpush1.bf16.msra.mxu0 0
    %961 = vmatprep.subr.bf16.mxu0 0
    %962 = vmatpush1.bf16.msra.mxu0 0
    %963 = vmatprep.subr.bf16.mxu0 0
    %964 = vmatpush1.bf16.msra.mxu0 0
    %965 = vmatprep.subr.bf16.mxu0 0
    %966 = vmatpush1.bf16.msra.mxu0 0
    %967 = vmatprep.subr.bf16.mxu0 0
    %968 = vmatpush1.bf16.msra.mxu0 0
    %969 = vmatprep.subr.bf16.mxu0 0
    %970 = vmatpush1.bf16.msra.mxu0 0
    %971 = vmatprep.mubr.bf16.mxu0 0
    %972 = vmatmul.mubr.bf16.gmra.mrb[0].mxu0 %v928
    %v973 = vpop.f32.mrb[0].mxu0
    %v974 = vadd.f32 %v901, %v973
    %v975 = vpop.f32.mrb[0].mxu0
    %v976 = vpop.f32.mrb[0].mxu0
    %v977 = vadd.f32 %v901, %v976
    %v978 = vpop.f32.mrb[0].mxu0
    %979 = vmatprep.mubr.bf16.mxu0 0
    %980 = vmatmul.mubr.bf16.gmra.mrb[0].mxu0 %v931
    %v981 = vpop.f32.mrb[0].mxu0
    %v982 = vadd.f32 %v901, %v981
    %v983 = vpop.f32.mrb[0].mxu0
    %v984 = vpop.f32.mrb[0].mxu0
    %v985 = vadd.f32 %v901, %v984
    %v986 = vpop.f32.mrb[0].mxu0
    %987 = vmatprep.mubr.bf16.mxu0 0
    %988 = vmatmul.mubr.bf16.gmra.mrb[0].mxu0 %v934
    %v989 = vpop.f32.mrb[0].mxu0
    %v990 = vadd.f32 %v901, %v989
    %v991 = vpop.f32.mrb[0].mxu0
    %v992 = vpop.f32.mrb[0].mxu0
    %v993 = vadd.f32 %v901, %v992
    %v994 = vpop.f32.mrb[0].mxu0
    %995 = vmatprep.mubr.bf16.mxu0 0
    %996 = vmatmul.mubr.bf16.gmra.mrb[0].mxu0 %v937
    %v997 = vpop.f32.mrb[0].mxu0
    %v998 = vadd.f32 %v901, %v997
    %v999 = vpop.f32.mrb[0].mxu0
    %v1000 = vpop.f32.mrb[0].mxu0
    %v1001 = vadd.f32 %v901, %v1000
    %v1002 = vpop.f32.mrb[0].mxu0
    %1003 = vdwg.mxu0
    %v1008 = vunpack.c.l.b16 %v888
    %v1009 = vunpack.c.l.b16 %v889
    %v1010 = vunpack.c.l.b16 %v890
    %v1011 = vunpack.c.l.b16 %v891
    %v1012 = vpack.c.b16 %v1009, %v1008
    %v1013 = vpack.c.b16 %v1011, %v1010
    %1016 = vmatprep.subr.bf16.mxu0 0
    %1017 = vmatpush1.bf16.msra.mxu0 %v1012
    %1018 = vmatprep.subr.bf16.mxu0 0
    %1019 = vmatpush1.bf16.msra.mxu0 %v1013
    %1020 = vmatprep.subr.bf16.mxu0 0
    %1021 = vmatpush1.bf16.msra.mxu0 0
    %1022 = vmatprep.subr.bf16.mxu0 0
    %1023 = vmatpush1.bf16.msra.mxu0 0
    %1024 = vmatprep.subr.bf16.mxu0 0
    %1025 = vmatpush1.bf16.msra.mxu0 0
    %1026 = vmatprep.subr.bf16.mxu0 0
    %1027 = vmatpush1.bf16.msra.mxu0 0
    %1028 = vmatprep.subr.bf16.mxu0 0
    %1029 = vmatpush1.bf16.msra.mxu0 0
    %1030 = vmatprep.subr.bf16.mxu0 0
    %1031 = vmatpush1.bf16.msra.mxu0 0
    %1032 = vmatprep.subr.bf16.mxu0 0
    %1033 = vmatpush1.bf16.msra.mxu0 0
    %1034 = vmatprep.subr.bf16.mxu0 0
    %1035 = vmatpush1.bf16.msra.mxu0 0
    %1036 = vmatprep.subr.bf16.mxu0 0
    %1037 = vmatpush1.bf16.msra.mxu0 0
    %1038 = vmatprep.subr.bf16.mxu0 0
    %1039 = vmatpush1.bf16.msra.mxu0 0
    %1040 = vmatprep.subr.bf16.mxu0 0
    %1041 = vmatpush1.bf16.msra.mxu0 0
    %1042 = vmatprep.subr.bf16.mxu0 0
    %1043 = vmatpush1.bf16.msra.mxu0 0
    %1044 = vmatprep.subr.bf16.mxu0 0
    %1045 = vmatpush1.bf16.msra.mxu0 0
    %1046 = vmatprep.subr.bf16.mxu0 0
    %1047 = vmatpush1.bf16.msra.mxu0 0
    %1048 = vmatprep.mubr.bf16.mxu0 0
    %1049 = vmatmul.mubr.bf16.gmra.mrb[0].mxu0 %v297
    %v1050 = vpop.f32.mrb[0].mxu0
    %v1051 = vadd.f32 0.0, %v1050
    %v1052 = vpop.f32.mrb[0].mxu0
    %v1053 = vpop.f32.mrb[0].mxu0
    %v1054 = vpop.f32.mrb[0].mxu0
    %1055 = vdwg.mxu0
    %v1056 = vadd.f32 %v974, %v1051
    %v1057 = vxor.u32 %v1056, 2147483648
    %v1058 = vmul.f32 %v1057, 1.442695
    %v1059 = vpow.pop %v1058
    %v1060 = vadd.f32 %v1059, 1.0
    %v1061 = vrcp.pop %v1060
    %v1062 = vmul.f32 1.0, %v1061
    %v1063 = vmul.f32 %v1062, 2.0
    %v1064 = vsub.f32 %v1063, 1.0
    %v1065 = vsel %vm154, %v1064, %v1062
    %v1066 = vmul.f32 %v1065, 0.0
    %1068 = vrot.lane.b32.xlu0 %v1065, 64
    %v1069 = vpop.permute.xlu0 %1068
    %v1071 = vmul.f32 %v1065, %v1069
    %1073 = vrot.lane.b32.xlu0 %v1071, 32
    %v1074 = vpop.permute.xlu0 %1073
    %v1076 = vadd.f32 %v1066, %v1074
    %v1077 = vtanh.pop %v1076
    %1079 = vrot.lane.b32.xlu0 %v1077, 64
    %v1080 = vpop.permute.xlu0 %1079
    %v1082 = vmul.f32 %v1065, %v1080
    %v1083 = vpack.c.bf16 %v1082, %v1082
    %1085 = vrot.lane.b32.xlu0 %v1083, 32
    %v1086 = vpop.permute.xlu0 %1085
    %v1088 = vsel %vm206, %v1086, 0
    %1090 = vmatprep.subr.bf16.mxu0 0
    %1091 = vmatpush1.bf16.msra.mxu0 %v1012
    %1092 = vmatprep.subr.bf16.mxu0 0
    %1093 = vmatpush1.bf16.msra.mxu0 %v1013
    %1094 = vmatprep.subr.bf16.mxu0 0
    %1095 = vmatpush1.bf16.msra.mxu0 0
    %1096 = vmatprep.subr.bf16.mxu0 0
    %1097 = vmatpush1.bf16.msra.mxu0 0
    %1098 = vmatprep.subr.bf16.mxu0 0
    %1099 = vmatpush1.bf16.msra.mxu0 0
    %1100 = vmatprep.subr.bf16.mxu0 0
    %1101 = vmatpush1.bf16.msra.mxu0 0
    %1102 = vmatprep.subr.bf16.mxu0 0
    %1103 = vmatpush1.bf16.msra.mxu0 0
    %1104 = vmatprep.subr.bf16.mxu0 0
    %1105 = vmatpush1.bf16.msra.mxu0 0
    %1106 = vmatprep.subr.bf16.mxu0 0
    %1107 = vmatpush1.bf16.msra.mxu0 0
    %1108 = vmatprep.subr.bf16.mxu0 0
    %1109 = vmatpush1.bf16.msra.mxu0 0
    %1110 = vmatprep.subr.bf16.mxu0 0
    %1111 = vmatpush1.bf16.msra.mxu0 0
    %1112 = vmatprep.subr.bf16.mxu0 0
    %1113 = vmatpush1.bf16.msra.mxu0 0
    %1114 = vmatprep.subr.bf16.mxu0 0
    %1115 = vmatpush1.bf16.msra.mxu0 0
    %1116 = vmatprep.subr.bf16.mxu0 0
    %1117 = vmatpush1.bf16.msra.mxu0 0
    %1118 = vmatprep.subr.bf16.mxu0 0
    %1119 = vmatpush1.bf16.msra.mxu0 0
    %1120 = vmatprep.subr.bf16.mxu0 0
    %1121 = vmatpush1.bf16.msra.mxu0 0
    %1122 = vmatprep.mubr.bf16.mxu0 0
    %1123 = vmatmul.mubr.bf16.gmra.mrb[0].mxu0 %v1088
    %v1124 = vpop.f32.mrb[0].mxu0
    %v1125 = vadd.f32 0.0, %v1124
    %v1126 = vpop.f32.mrb[0].mxu0
    %v1127 = vpop.f32.mrb[0].mxu0
    %v1128 = vpop.f32.mrb[0].mxu0
    %1129 = vdwg.mxu0
    %v1130 = vadd.f32 %v977, %v1125
    %v1131 = vxor.u32 %v1130, 2147483648
    %v1132 = vmul.f32 %v1131, 1.442695
    %v1133 = vpow.pop %v1132
    %v1134 = vadd.f32 %v1133, 1.0
    %v1135 = vrcp.pop %v1134
    %v1136 = vmul.f32 1.0, %v1135
    %v1137 = vmul.f32 %v1136, 2.0
    %v1138 = vsub.f32 %v1137, 1.0
    %v1139 = vsel %vm154, %v1138, %v1136
    %v1140 = vmul.f32 %v1139, %v1076
    %1142 = vrot.lane.b32.xlu0 %v1139, 64
    %v1143 = vpop.permute.xlu0 %1142
    %v1145 = vmul.f32 %v1139, %v1143
    %1147 = vrot.lane.b32.xlu0 %v1145, 32
    %v1148 = vpop.permute.xlu0 %1147
    %v1150 = vadd.f32 %v1140, %v1148
    %v1151 = vtanh.pop %v1150
    %1153 = vrot.lane.b32.xlu0 %v1151, 64
    %v1154 = vpop.permute.xlu0 %1153
    %v1156 = vmul.f32 %v1139, %v1154
    %v1157 = vpack.c.bf16 %v1156, %v1156
    %1159 = vrot.lane.b32.xlu0 %v1157, 32
    %v1160 = vpop.permute.xlu0 %1159
    %v1162 = vsel %vm206, %v1160, 0
    %1164 = vmatprep.subr.bf16.mxu0 0
    %1165 = vmatpush1.bf16.msra.mxu0 %v1012
    %1166 = vmatprep.subr.bf16.mxu0 0
    %1167 = vmatpush1.bf16.msra.mxu0 %v1013
    %1168 = vmatprep.subr.bf16.mxu0 0
    %1169 = vmatpush1.bf16.msra.mxu0 0
    %1170 = vmatprep.subr.bf16.mxu0 0
    %1171 = vmatpush1.bf16.msra.mxu0 0
    %1172 = vmatprep.subr.bf16.mxu0 0
    %1173 = vmatpush1.bf16.msra.mxu0 0
    %1174 = vmatprep.subr.bf16.mxu0 0
    %1175 = vmatpush1.bf16.msra.mxu0 0
    %1176 = vmatprep.subr.bf16.mxu0 0
    %1177 = vmatpush1.bf16.msra.mxu0 0
    %1178 = vmatprep.subr.bf16.mxu0 0
    %1179 = vmatpush1.bf16.msra.mxu0 0
    %1180 = vmatprep.subr.bf16.mxu0 0
    %1181 = vmatpush1.bf16.msra.mxu0 0
    %1182 = vmatprep.subr.bf16.mxu0 0
    %1183 = vmatpush1.bf16.msra.mxu0 0
    %1184 = vmatprep.subr.bf16.mxu0 0
    %1185 = vmatpush1.bf16.msra.mxu0 0
    %1186 = vmatprep.subr.bf16.mxu0 0
    %1187 = vmatpush1.bf16.msra.mxu0 0
    %1188 = vmatprep.subr.bf16.mxu0 0
    %1189 = vmatpush1.bf16.msra.mxu0 0
    %1190 = vmatprep.subr.bf16.mxu0 0
    %1191 = vmatpush1.bf16.msra.mxu0 0
    %1192 = vmatprep.subr.bf16.mxu0 0
    %1193 = vmatpush1.bf16.msra.mxu0 0
    %1194 = vmatprep.subr.bf16.mxu0 0
    %1195 = vmatpush1.bf16.msra.mxu0 0
    %1196 = vmatprep.mubr.bf16.mxu0 0
    %1197 = vmatmul.mubr.bf16.gmra.mrb[0].mxu0 %v1162
    %v1198 = vpop.f32.mrb[0].mxu0
    %v1199 = vadd.f32 0.0, %v1198
    %v1200 = vpop.f32.mrb[0].mxu0
    %v1201 = vpop.f32.mrb[0].mxu0
    %v1202 = vpop.f32.mrb[0].mxu0
    %1203 = vdwg.mxu0
    %v1204 = vadd.f32 %v982, %v1199
    %v1205 = vxor.u32 %v1204, 2147483648
    %v1206 = vmul.f32 %v1205, 1.442695
    %v1207 = vpow.pop %v1206
    %v1208 = vadd.f32 %v1207, 1.0
    %v1209 = vrcp.pop %v1208
    %v1210 = vmul.f32 1.0, %v1209
    %v1211 = vmul.f32 %v1210, 2.0
    %v1212 = vsub.f32 %v1211, 1.0
    %v1213 = vsel %vm154, %v1212, %v1210
    %v1214 = vmul.f32 %v1213, %v1150
    %1216 = vrot.lane.b32.xlu0 %v1213, 64
    %v1217 = vpop.permute.xlu0 %1216
    %v1219 = vmul.f32 %v1213, %v1217
    %1221 = vrot.lane.b32.xlu0 %v1219, 32
    %v1222 = vpop.permute.xlu0 %1221
    %v1224 = vadd.f32 %v1214, %v1222
    %v1225 = vtanh.pop %v1224
    %1227 = vrot.lane.b32.xlu0 %v1225, 64
    %v1228 = vpop.permute.xlu0 %1227
    %v1230 = vmul.f32 %v1213, %v1228
    %v1231 = vpack.c.bf16 %v1230, %v1230
    %1233 = vrot.lane.b32.xlu0 %v1231, 32
    %v1234 = vpop.permute.xlu0 %1233
    %v1236 = vsel %vm206, %v1234, 0
    %1238 = vmatprep.subr.bf16.mxu0 0
    %1239 = vmatpush1.bf16.msra.mxu0 %v1012
    %1240 = vmatprep.subr.bf16.mxu0 0
    %1241 = vmatpush1.bf16.msra.mxu0 %v1013
    %1242 = vmatprep.subr.bf16.mxu0 0
    %1243 = vmatpush1.bf16.msra.mxu0 0
    %1244 = vmatprep.subr.bf16.mxu0 0
    %1245 = vmatpush1.bf16.msra.mxu0 0
    %1246 = vmatprep.subr.bf16.mxu0 0
    %1247 = vmatpush1.bf16.msra.mxu0 0
    %1248 = vmatprep.subr.bf16.mxu0 0
    %1249 = vmatpush1.bf16.msra.mxu0 0
    %1250 = vmatprep.subr.bf16.mxu0 0
    %1251 = vmatpush1.bf16.msra.mxu0 0
    %1252 = vmatprep.subr.bf16.mxu0 0
    %1253 = vmatpush1.bf16.msra.mxu0 0
    %1254 = vmatprep.subr.bf16.mxu0 0
    %1255 = vmatpush1.bf16.msra.mxu0 0
    %1256 = vmatprep.subr.bf16.mxu0 0
    %1257 = vmatpush1.bf16.msra.mxu0 0
    %1258 = vmatprep.subr.bf16.mxu0 0
    %1259 = vmatpush1.bf16.msra.mxu0 0
    %1260 = vmatprep.subr.bf16.mxu0 0
    %1261 = vmatpush1.bf16.msra.mxu0 0
    %1262 = vmatprep.subr.bf16.mxu0 0
    %1263 = vmatpush1.bf16.msra.mxu0 0
    %1264 = vmatprep.subr.bf16.mxu0 0
    %1265 = vmatpush1.bf16.msra.mxu0 0
    %1266 = vmatprep.subr.bf16.mxu0 0
    %1267 = vmatpush1.bf16.msra.mxu0 0
    %1268 = vmatprep.subr.bf16.mxu0 0
    %1269 = vmatpush1.bf16.msra.mxu0 0
    %1270 = vmatprep.mubr.bf16.mxu0 0
    %1271 = vmatmul.mubr.bf16.gmra.mrb[0].mxu0 %v1236
    %v1272 = vpop.f32.mrb[0].mxu0
    %v1273 = vadd.f32 0.0, %v1272
    %v1274 = vpop.f32.mrb[0].mxu0
    %v1275 = vpop.f32.mrb[0].mxu0
    %v1276 = vpop.f32.mrb[0].mxu0
    %1277 = vdwg.mxu0
    %v1278 = vadd.f32 %v985, %v1273
    %v1279 = vxor.u32 %v1278, 2147483648
    %v1280 = vmul.f32 %v1279, 1.442695
    %v1281 = vpow.pop %v1280
    %v1282 = vadd.f32 %v1281, 1.0
    %v1283 = vrcp.pop %v1282
    %v1284 = vmul.f32 1.0, %v1283
    %v1285 = vmul.f32 %v1284, 2.0
    %v1286 = vsub.f32 %v1285, 1.0
    %v1287 = vsel %vm154, %v1286, %v1284
    %v1288 = vmul.f32 %v1287, %v1224
    %1290 = vrot.lane.b32.xlu0 %v1287, 64
    %v1291 = vpop.permute.xlu0 %1290
    %v1293 = vmul.f32 %v1287, %v1291
    %1295 = vrot.lane.b32.xlu0 %v1293, 32
    %v1296 = vpop.permute.xlu0 %1295
    %v1298 = vadd.f32 %v1288, %v1296
    %v1299 = vtanh.pop %v1298
    %1301 = vrot.lane.b32.xlu0 %v1299, 64
    %v1302 = vpop.permute.xlu0 %1301
    %v1304 = vmul.f32 %v1287, %v1302
    %v1305 = vpack.c.bf16 %v1304, %v1304
    %1307 = vrot.lane.b32.xlu0 %v1305, 32
    %v1308 = vpop.permute.xlu0 %1307
    %v1310 = vsel %vm206, %v1308, 0
    %1312 = vmatprep.subr.bf16.mxu0 0
    %1313 = vmatpush1.bf16.msra.mxu0 %v1012
    %1314 = vmatprep.subr.bf16.mxu0 0
    %1315 = vmatpush1.bf16.msra.mxu0 %v1013
    %1316 = vmatprep.subr.bf16.mxu0 0
    %1317 = vmatpush1.bf16.msra.mxu0 0
    %1318 = vmatprep.subr.bf16.mxu0 0
    %1319 = vmatpush1.bf16.msra.mxu0 0
    %1320 = vmatprep.subr.bf16.mxu0 0
    %1321 = vmatpush1.bf16.msra.mxu0 0
    %1322 = vmatprep.subr.bf16.mxu0 0
    %1323 = vmatpush1.bf16.msra.mxu0 0
    %1324 = vmatprep.subr.bf16.mxu0 0
    %1325 = vmatpush1.bf16.msra.mxu0 0
    %1326 = vmatprep.subr.bf16.mxu0 0
    %1327 = vmatpush1.bf16.msra.mxu0 0
    %1328 = vmatprep.subr.bf16.mxu0 0
    %1329 = vmatpush1.bf16.msra.mxu0 0
    %1330 = vmatprep.subr.bf16.mxu0 0
    %1331 = vmatpush1.bf16.msra.mxu0 0
    %1332 = vmatprep.subr.bf16.mxu0 0
    %1333 = vmatpush1.bf16.msra.mxu0 0
    %1334 = vmatprep.subr.bf16.mxu0 0
    %1335 = vmatpush1.bf16.msra.mxu0 0
    %1336 = vmatprep.subr.bf16.mxu0 0
    %1337 = vmatpush1.bf16.msra.mxu0 0
    %1338 = vmatprep.subr.bf16.mxu0 0
    %1339 = vmatpush1.bf16.msra.mxu0 0
    %1340 = vmatprep.subr.bf16.mxu0 0
    %1341 = vmatpush1.bf16.msra.mxu0 0
    %1342 = vmatprep.subr.bf16.mxu0 0
    %1343 = vmatpush1.bf16.msra.mxu0 0
    %1344 = vmatprep.mubr.bf16.mxu0 0
    %1345 = vmatmul.mubr.bf16.gmra.mrb[0].mxu0 %v1310
    %v1346 = vpop.f32.mrb[0].mxu0
    %v1347 = vadd.f32 0.0, %v1346
    %v1348 = vpop.f32.mrb[0].mxu0
    %v1349 = vpop.f32.mrb[0].mxu0
    %v1350 = vpop.f32.mrb[0].mxu0
    %1351 = vdwg.mxu0
    %v1352 = vadd.f32 %v990, %v1347
    %v1353 = vxor.u32 %v1352, 2147483648
    %v1354 = vmul.f32 %v1353, 1.442695
    %v1355 = vpow.pop %v1354
    %v1356 = vadd.f32 %v1355, 1.0
    %v1357 = vrcp.pop %v1356
    %v1358 = vmul.f32 1.0, %v1357
    %v1359 = vmul.f32 %v1358, 2.0
    %v1360 = vsub.f32 %v1359, 1.0
    %v1361 = vsel %vm154, %v1360, %v1358
    %v1362 = vmul.f32 %v1361, %v1298
    %1364 = vrot.lane.b32.xlu0 %v1361, 64
    %v1365 = vpop.permute.xlu0 %1364
    %v1367 = vmul.f32 %v1361, %v1365
    %1369 = vrot.lane.b32.xlu0 %v1367, 32
    %v1370 = vpop.permute.xlu0 %1369
    %v1372 = vadd.f32 %v1362, %v1370
    %v1373 = vtanh.pop %v1372
    %1375 = vrot.lane.b32.xlu0 %v1373, 64
    %v1376 = vpop.permute.xlu0 %1375
    %v1378 = vmul.f32 %v1361, %v1376
    %v1379 = vpack.c.bf16 %v1378, %v1378
    %1381 = vrot.lane.b32.xlu0 %v1379, 32
    %v1382 = vpop.permute.xlu0 %1381
    %v1384 = vsel %vm206, %v1382, 0
    %1386 = vmatprep.subr.bf16.mxu0 0
    %1387 = vmatpush1.bf16.msra.mxu0 %v1012
    %1388 = vmatprep.subr.bf16.mxu0 0
    %1389 = vmatpush1.bf16.msra.mxu0 %v1013
    %1390 = vmatprep.subr.bf16.mxu0 0
    %1391 = vmatpush1.bf16.msra.mxu0 0
    %1392 = vmatprep.subr.bf16.mxu0 0
    %1393 = vmatpush1.bf16.msra.mxu0 0
    %1394 = vmatprep.subr.bf16.mxu0 0
    %1395 = vmatpush1.bf16.msra.mxu0 0
    %1396 = vmatprep.subr.bf16.mxu0 0
    %1397 = vmatpush1.bf16.msra.mxu0 0
    %1398 = vmatprep.subr.bf16.mxu0 0
    %1399 = vmatpush1.bf16.msra.mxu0 0
    %1400 = vmatprep.subr.bf16.mxu0 0
    %1401 = vmatpush1.bf16.msra.mxu0 0
    %1402 = vmatprep.subr.bf16.mxu0 0
    %1403 = vmatpush1.bf16.msra.mxu0 0
    %1404 = vmatprep.subr.bf16.mxu0 0
    %1405 = vmatpush1.bf16.msra.mxu0 0
    %1406 = vmatprep.subr.bf16.mxu0 0
    %1407 = vmatpush1.bf16.msra.mxu0 0
    %1408 = vmatprep.subr.bf16.mxu0 0
    %1409 = vmatpush1.bf16.msra.mxu0 0
    %1410 = vmatprep.subr.bf16.mxu0 0
    %1411 = vmatpush1.bf16.msra.mxu0 0
    %1412 = vmatprep.subr.bf16.mxu0 0
    %1413 = vmatpush1.bf16.msra.mxu0 0
    %1414 = vmatprep.subr.bf16.mxu0 0
    %1415 = vmatpush1.bf16.msra.mxu0 0
    %1416 = vmatprep.subr.bf16.mxu0 0
    %1417 = vmatpush1.bf16.msra.mxu0 0
    %1418 = vmatprep.mubr.bf16.mxu0 0
    %1419 = vmatmul.mubr.bf16.gmra.mrb[0].mxu0 %v1384
    %v1420 = vpop.f32.mrb[0].mxu0
    %v1421 = vadd.f32 0.0, %v1420
    %v1422 = vpop.f32.mrb[0].mxu0
    %v1423 = vpop.f32.mrb[0].mxu0
    %v1424 = vpop.f32.mrb[0].mxu0
    %1425 = vdwg.mxu0
    %v1426 = vadd.f32 %v993, %v1421
    %v1427 = vxor.u32 %v1426, 2147483648
    %v1428 = vmul.f32 %v1427, 1.442695
    %v1429 = vpow.pop %v1428
    %v1430 = vadd.f32 %v1429, 1.0
    %v1431 = vrcp.pop %v1430
    %v1432 = vmul.f32 1.0, %v1431
    %v1433 = vmul.f32 %v1432, 2.0
    %v1434 = vsub.f32 %v1433, 1.0
    %v1435 = vsel %vm154, %v1434, %v1432
    %v1436 = vmul.f32 %v1435, %v1372
    %1438 = vrot.lane.b32.xlu0 %v1435, 64
    %v1439 = vpop.permute.xlu0 %1438
    %v1441 = vmul.f32 %v1435, %v1439
    %1443 = vrot.lane.b32.xlu0 %v1441, 32
    %v1444 = vpop.permute.xlu0 %1443
    %v1446 = vadd.f32 %v1436, %v1444
    %v1447 = vtanh.pop %v1446
    %1449 = vrot.lane.b32.xlu0 %v1447, 64
    %v1450 = vpop.permute.xlu0 %1449
    %v1452 = vmul.f32 %v1435, %v1450
    %v1453 = vpack.c.bf16 %v1452, %v1452
    %1455 = vrot.lane.b32.xlu0 %v1453, 32
    %v1456 = vpop.permute.xlu0 %1455
    %v1458 = vsel %vm206, %v1456, 0
    %1460 = vmatprep.subr.bf16.mxu0 0
    %1461 = vmatpush1.bf16.msra.mxu0 %v1012
    %1462 = vmatprep.subr.bf16.mxu0 0
    %1463 = vmatpush1.bf16.msra.mxu0 %v1013
    %1464 = vmatprep.subr.bf16.mxu0 0
    %1465 = vmatpush1.bf16.msra.mxu0 0
    %1466 = vmatprep.subr.bf16.mxu0 0
    %1467 = vmatpush1.bf16.msra.mxu0 0
    %1468 = vmatprep.subr.bf16.mxu0 0
    %1469 = vmatpush1.bf16.msra.mxu0 0
    %1470 = vmatprep.subr.bf16.mxu0 0
    %1471 = vmatpush1.bf16.msra.mxu0 0
    %1472 = vmatprep.subr.bf16.mxu0 0
    %1473 = vmatpush1.bf16.msra.mxu0 0
    %1474 = vmatprep.subr.bf16.mxu0 0
    %1475 = vmatpush1.bf16.msra.mxu0 0
    %1476 = vmatprep.subr.bf16.mxu0 0
    %1477 = vmatpush1.bf16.msra.mxu0 0
    %1478 = vmatprep.subr.bf16.mxu0 0
    %1479 = vmatpush1.bf16.msra.mxu0 0
    %1480 = vmatprep.subr.bf16.mxu0 0
    %1481 = vmatpush1.bf16.msra.mxu0 0
    %1482 = vmatprep.subr.bf16.mxu0 0
    %1483 = vmatpush1.bf16.msra.mxu0 0
    %1484 = vmatprep.subr.bf16.mxu0 0
    %1485 = vmatpush1.bf16.msra.mxu0 0
    %1486 = vmatprep.subr.bf16.mxu0 0
    %1487 = vmatpush1.bf16.msra.mxu0 0
    %1488 = vmatprep.subr.bf16.mxu0 0
    %1489 = vmatpush1.bf16.msra.mxu0 0
    %1490 = vmatprep.subr.bf16.mxu0 0
    %1491 = vmatpush1.bf16.msra.mxu0 0
    %1492 = vmatprep.mubr.bf16.mxu0 0
    %1493 = vmatmul.mubr.bf16.gmra.mrb[0].mxu0 %v1458
    %v1494 = vpop.f32.mrb[0].mxu0
    %v1495 = vadd.f32 0.0, %v1494
    %v1496 = vpop.f32.mrb[0].mxu0
    %v1497 = vpop.f32.mrb[0].mxu0
    %v1498 = vpop.f32.mrb[0].mxu0
    %1499 = vdwg.mxu0
    %v1500 = vadd.f32 %v998, %v1495
    %v1501 = vxor.u32 %v1500, 2147483648
    %v1502 = vmul.f32 %v1501, 1.442695
    %v1503 = vpow.pop %v1502
    %v1504 = vadd.f32 %v1503, 1.0
    %v1505 = vrcp.pop %v1504
    %v1506 = vmul.f32 1.0, %v1505
    %v1507 = vmul.f32 %v1506, 2.0
    %v1508 = vsub.f32 %v1507, 1.0
    %v1509 = vsel %vm154, %v1508, %v1506
    %v1510 = vmul.f32 %v1509, %v1446
    %1512 = vrot.lane.b32.xlu0 %v1509, 64
    %v1513 = vpop.permute.xlu0 %1512
    %v1515 = vmul.f32 %v1509, %v1513
    %1517 = vrot.lane.b32.xlu0 %v1515, 32
    %v1518 = vpop.permute.xlu0 %1517
    %v1520 = vadd.f32 %v1510, %v1518
    %v1521 = vtanh.pop %v1520
    %1523 = vrot.lane.b32.xlu0 %v1521, 64
    %v1524 = vpop.permute.xlu0 %1523
    %v1526 = vmul.f32 %v1509, %v1524
    %v1527 = vpack.c.bf16 %v1526, %v1526
    %1529 = vrot.lane.b32.xlu0 %v1527, 32
    %v1530 = vpop.permute.xlu0 %1529
    %v1532 = vsel %vm206, %v1530, 0
    %1534 = vmatprep.subr.bf16.mxu0 0
    %1535 = vmatpush1.bf16.msra.mxu0 %v1012
    %1536 = vmatprep.subr.bf16.mxu0 0
    %1537 = vmatpush1.bf16.msra.mxu0 %v1013
    %1538 = vmatprep.subr.bf16.mxu0 0
    %1539 = vmatpush1.bf16.msra.mxu0 0
    %1540 = vmatprep.subr.bf16.mxu0 0
    %1541 = vmatpush1.bf16.msra.mxu0 0
    %1542 = vmatprep.subr.bf16.mxu0 0
    %1543 = vmatpush1.bf16.msra.mxu0 0
    %1544 = vmatprep.subr.bf16.mxu0 0
    %1545 = vmatpush1.bf16.msra.mxu0 0
    %1546 = vmatprep.subr.bf16.mxu0 0
    %1547 = vmatpush1.bf16.msra.mxu0 0
    %1548 = vmatprep.subr.bf16.mxu0 0
    %1549 = vmatpush1.bf16.msra.mxu0 0
    %1550 = vmatprep.subr.bf16.mxu0 0
    %1551 = vmatpush1.bf16.msra.mxu0 0
    %1552 = vmatprep.subr.bf16.mxu0 0
    %1553 = vmatpush1.bf16.msra.mxu0 0
    %1554 = vmatprep.subr.bf16.mxu0 0
    %1555 = vmatpush1.bf16.msra.mxu0 0
    %1556 = vmatprep.subr.bf16.mxu0 0
    %1557 = vmatpush1.bf16.msra.mxu0 0
    %1558 = vmatprep.subr.bf16.mxu0 0
    %1559 = vmatpush1.bf16.msra.mxu0 0
    %1560 = vmatprep.subr.bf16.mxu0 0
    %1561 = vmatpush1.bf16.msra.mxu0 0
    %1562 = vmatprep.subr.bf16.mxu0 0
    %1563 = vmatpush1.bf16.msra.mxu0 0
    %1564 = vmatprep.subr.bf16.mxu0 0
    %1565 = vmatpush1.bf16.msra.mxu0 0
    %1566 = vmatprep.mubr.bf16.mxu0 0
    %1567 = vmatmul.mubr.bf16.gmra.mrb[0].mxu0 %v1532
    %v1568 = vpop.f32.mrb[0].mxu0
    %v1569 = vadd.f32 0.0, %v1568
    %v1570 = vpop.f32.mrb[0].mxu0
    %v1571 = vpop.f32.mrb[0].mxu0
    %v1572 = vpop.f32.mrb[0].mxu0
    %1573 = vdwg.mxu0
    %v1574 = vadd.f32 %v1001, %v1569
    %v1575 = vxor.u32 %v1574, 2147483648
    %v1576 = vmul.f32 %v1575, 1.442695
    %v1577 = vpow.pop %v1576
    %v1578 = vadd.f32 %v1577, 1.0
    %v1579 = vrcp.pop %v1578
    %v1580 = vmul.f32 1.0, %v1579
    %v1581 = vmul.f32 %v1580, 2.0
    %v1582 = vsub.f32 %v1581, 1.0
    %v1583 = vsel %vm154, %v1582, %v1580
    %v1584 = vmul.f32 %v1583, %v1520
    %1586 = vrot.lane.b32.xlu0 %v1583, 64
    %v1587 = vpop.permute.xlu0 %1586
    %v1589 = vmul.f32 %v1583, %v1587
    %1591 = vrot.lane.b32.xlu0 %v1589, 32
    %v1592 = vpop.permute.xlu0 %1591
    %v1594 = vadd.f32 %v1584, %v1592
    %v1595 = vtanh.pop %v1594
    %1597 = vrot.lane.b32.xlu0 %v1595, 64
    %v1598 = vpop.permute.xlu0 %1597
    %v1600 = vmul.f32 %v1583, %v1598
    %v1601 = vpack.c.bf16 %v1600, %v1600
    %v1602 = vld [vmem:[%s8] sm:$0xf]
    %v1603 = vld [vmem:[%s8 + $0x4] sm:$0xf]
    %v1604 = vld [vmem:[%s8 + $0x8] sm:$0xf]
    %v1605 = vld [vmem:[%s8 + $0xc] sm:$0xf]
    %v1606 = vld [vmem:[%s9] sm:$0x1]
    %v1608 = vlaneseq
    %v1609 = vshrl.u32 %v1608, 7
    %v1610 = vsub.s32 0, %v1609
    %v1611 = vrot.slane %v1606, %v1610
    %1614 = vrot.lane.b32.xlu0 %v1601, 32
    %v1615 = vpop.permute.xlu0 %1614
    %v1620 = vunpack.c.l.b16 %v1602
    %v1621 = vunpack.c.l.b16 %v1603
    %v1622 = vunpack.c.l.b16 %v1604
    %v1623 = vunpack.c.l.b16 %v1605
    %v1624 = vpack.c.b16 %v1621, %v1620
    %v1625 = vpack.c.b16 %v1623, %v1622
    %v1629 = vsel %vm206, %v1615, 0
    %1631 = vmatprep.subr.bf16.mxu0 0
    %1632 = vmatpush1.bf16.msra.mxu0 %v1624
    %1633 = vmatprep.subr.bf16.mxu0 0
    %1634 = vmatpush1.bf16.msra.mxu0 %v1625
    %1635 = vmatprep.subr.bf16.mxu0 0
    %1636 = vmatpush1.bf16.msra.mxu0 0
    %1637 = vmatprep.subr.bf16.mxu0 0
    %1638 = vmatpush1.bf16.msra.mxu0 0
    %1639 = vmatprep.subr.bf16.mxu0 0
    %1640 = vmatpush1.bf16.msra.mxu0 0
    %1641 = vmatprep.subr.bf16.mxu0 0
    %1642 = vmatpush1.bf16.msra.mxu0 0
    %1643 = vmatprep.subr.bf16.mxu0 0
    %1644 = vmatpush1.bf16.msra.mxu0 0
    %1645 = vmatprep.subr.bf16.mxu0 0
    %1646 = vmatpush1.bf16.msra.mxu0 0
    %1647 = vmatprep.subr.bf16.mxu0 0
    %1648 = vmatpush1.bf16.msra.mxu0 0
    %1649 = vmatprep.subr.bf16.mxu0 0
    %1650 = vmatpush1.bf16.msra.mxu0 0
    %1651 = vmatprep.subr.bf16.mxu0 0
    %1652 = vmatpush1.bf16.msra.mxu0 0
    %1653 = vmatprep.subr.bf16.mxu0 0
    %1654 = vmatpush1.bf16.msra.mxu0 0
    %1655 = vmatprep.subr.bf16.mxu0 0
    %1656 = vmatpush1.bf16.msra.mxu0 0
    %1657 = vmatprep.subr.bf16.mxu0 0
    %1658 = vmatpush1.bf16.msra.mxu0 0
    %1659 = vmatprep.subr.bf16.mxu0 0
    %1660 = vmatpush1.bf16.msra.mxu0 0
    %1661 = vmatprep.subr.bf16.mxu0 0
    %1662 = vmatpush1.bf16.msra.mxu0 0
    %1663 = vmatprep.mubr.bf16.mxu0 0
    %1664 = vmatmul.mubr.bf16.gmra.mrb[0].mxu0 %v1629
    %v1665 = vpop.f32.mrb[0].mxu0
    %v1666 = vadd.f32 %v1611, %v1665
    %v1667 = vpop.f32.mrb[0].mxu0
    %v1668 = vpop.f32.mrb[0].mxu0
    %v1669 = vpop.f32.mrb[0].mxu0
    %1670 = vdwg.mxu0
    %vm1671 = vcmask 31744
    %1672 = vst.msk [vmem:[%s10] sm:$0xff] %vm1671, %v1666
    // Predicated region
    $region58: #{tpu_custom_call.1} parent=1 // pred_check
      _
    $region59: #{tpu_custom_call.1} parent=1 // pred_check_branch
      %1674 = sbr.rel (0) target = $region61
    $region60: #{tpu_custom_call.1} parent=1 // pred_region
      _
    $region61: #{tpu_custom_call.1} parent=1 // pred_fallthru
      _
    // Predicated region
    $region62: #{tpu_custom_call.1} parent=1 // pred_check
      _
    $region63: #{tpu_custom_call.1} parent=1 // pred_check_branch
      %1676 = sbr.rel (0) target = $region65
    $region64: #{tpu_custom_call.1} parent=1 // pred_region
      _
    $region65: #{tpu_custom_call.1} parent=1 // pred_fallthru
      _
    %1677 = vsyncpa [#allocation3], 1
    %1678 = vsyncpa [#allocation5], 1
    %1679 = vsyncpa [#allocation8], 1

</llo_original>
